<compile_context>
chip_gen: v7x
topology: tpu7x:2x2x1
jax: 0.10.0
libtpu: 0.0.40
codegen_flags: <defaults>
</compile_context>

<pallas_src>
import functools

import numpy as np
import jax
import jax.numpy as jnp
from jax import lax
from jax.experimental import pallas as pl
from jax.experimental.pallas import tpu as pltpu


# ----------------------------------------------------------------------------
# Host-side packing helpers (run once, outside the kernel)
# ----------------------------------------------------------------------------
def _zorder_of_flat(n):
    """z[h*n+w] = bit-interleaved (Morton) index, h-bits more significant per
    bit pair, so the 4 children of a 2x2 block enumerate in (kh, kw) order."""
    bits = int(np.log2(n))
    h, w = np.meshgrid(np.arange(n), np.arange(n), indexing="ij")
    z = np.zeros_like(h)
    for k in range(bits):
        z |= ((w >> k) & 1) << (2 * k)
        z |= ((h >> k) & 1) << (2 * k + 1)
    return z.reshape(-1)


def pack_params(params):
    """Rearrange PyTorch-layout params into the fused kernel's operands."""
    bf16 = jnp.bfloat16
    packed = {}

    # --- conv stack as block-diagonal matmuls on z-order flattened images ---
    # NOTE(v7x): kron block-diag is (R*R, R*R) for layer 0; fine at R=16
    # (256x256) but would have to switch to a dense per-block form for R >> 16
    # to stay inside 64 MiB VMEM.
    conv_ops = []
    spatial = 2 ** len(params["conv"])          # input resolution
    for li, (w, b) in enumerate(params["conv"]):
        co, ci, _, _ = w.shape
        out_sp = spatial // 2
        s_out = out_sp * out_sp
        # (kh, kw, ci, co) flattening matches the z-order column grouping.
        w_mat = jnp.transpose(w, (2, 3, 1, 0)).reshape(4 * ci, co)
        big_w = jnp.kron(jnp.eye(s_out, dtype=w.dtype), w_mat)   # block-diag
        big_b = jnp.tile(b, s_out)[None, :]                      # (1, s_out*co)
        if li == 0:
            # First layer has ci == 1: fold the z-order pixel permutation into
            # the weight rows so the kernel consumes the raw row-major image.
            assert ci == 1
            zmap = _zorder_of_flat(spatial)
            big_w = big_w[zmap, :]
        conv_ops.append((big_w.astype(bf16), big_b))
        spatial = out_sp
    packed["conv"] = conv_ops

    # --- preproc FC folded into the LSTM input projection (exact: no
    # nonlinearity between them); both composed in f32 on the host ---
    w_in = params["fc_w"] @ params["w_ih"]                              # (feat, 4H)
    u_bias = params["fc_b"] @ params["w_ih"] + params["b_lstm"]         # (4H,)
    packed["w_in"] = w_in.astype(bf16)
    packed["u_bias"] = u_bias[None, :]                                  # f32 (1, 4H)
    packed["w_hh"] = params["w_hh"].astype(bf16)                        # (H, 4H)
    packed["b_lstm"] = params["b_lstm"][None, :]                        # f32 (1, 4H)

    # --- 4 reward heads: fc1 and fc2 compose exactly (no activation);
    # pad to 128 output lanes for an unmasked, lane-dense store ---
    hw1, hb1, hw2, hb2 = params["hw1"], params["hb1"], params["hw2"], params["hb2"]
    w_head = jnp.concatenate([hw1[k] @ hw2[k] for k in range(4)], axis=1)     # (H, 4)
    b_head = jnp.stack([(hb1[k] @ hw2[k])[0] + hb2[k][0] for k in range(4)])  # (4,)
    packed["w_head"] = jnp.pad(w_head, ((0, 0), (0, 128 - 4))).astype(bf16)   # (H, 128)
    packed["b_head"] = jnp.pad(b_head, (0, 128 - 4))[None, :]                 # (1, 128)
    return packed


# ----------------------------------------------------------------------------
# Fused Pallas kernel: conv stack -> (folded FC+)LSTM over all shifts -> heads
# ----------------------------------------------------------------------------
def _fused_forward_kernel(*refs, n_conv, B, T, P, H):
    refs = list(refs)
    x_ref = refs[0]
    conv_refs = [(refs[1 + 2 * i], refs[2 + 2 * i]) for i in range(n_conv)]
    base = 1 + 2 * n_conv
    (win_ref, ubias_ref, whh_ref, blstm_ref, whead_ref, bhead_ref) = refs[base:base + 6]
    o_ref = refs[base + 6]

    f32, bf16 = jnp.float32, jnp.bfloat16
    G4 = 4 * H
    NB = B * P                                   # LSTM rows, ordered (b, p) b-major

    # ---- ImageEncoder: conv stack as block-diagonal bf16 matmuls on z-order
    # flattened images (channels-last, no reshapes between layers). ----
    a = x_ref[...]                                               # (B*T, R*R) f32
    for w_ref, b_ref in conv_refs:
        a = jnp.dot(a.astype(bf16), w_ref[...],
                    preferred_element_type=f32) + b_ref[...]
        a = jnp.maximum(a, 0.0)
    # a: (B*T, C_final) == flattened encoder features per frame.

    # ---- Folded FC + LSTM input projection, biases hoisted out of the loop:
    # real-frame rows carry fc_b@w_ih + b_lstm; padded timesteps get b_lstm. ----
    u = jnp.dot(a.astype(bf16), win_ref[...],
                preferred_element_type=f32) + ubias_ref[...]      # (B*T, 4H)
    pad_row = blstm_ref[...]                                      # (1, 4H)
    if P > 1:
        pad_rows = jnp.broadcast_to(pad_row, (P - 1, G4))         # hoisted broadcast

    whh = whh_ref[...]                                            # bf16 (H, 4H)
    h = jnp.zeros((NB, H), f32)
    c = jnp.zeros((NB, H), f32)
    # Fully unrolled time loop (T is static). Only h@w_hh is on the serial
    # chain; the xp construction below is independent of h (pure slices).
    for t in range(T):
        n_valid = min(P, T - t)
        pieces = []
        for b in range(B):
            # contiguous run u[b*T+t : b*T+t+n_valid]; never crosses the
            # per-batch 8-row sublane tile since t + n_valid <= T.
            pieces.append(u[b * T + t: b * T + t + n_valid, :])
            if n_valid < P:
                pieces.append(pad_rows[:P - n_valid, :])
        xp = pieces[0] if len(pieces) == 1 else jnp.concatenate(pieces, axis=0)
        z = xp + jnp.dot(h.astype(bf16), whh, preferred_element_type=f32)
        i_g = jax.nn.sigmoid(z[:, 0:H])
        f_g = jax.nn.sigmoid(z[:, H:2 * H])
        g_g = jnp.tanh(z[:, 2 * H:3 * H])
        o_g = jax.nn.sigmoid(z[:, 3 * H:4 * H])
        c = f_g * c + i_g * g_g
        h = o_g * jnp.tanh(c)

    # ---- MultiRewardRegHead: single folded matmul, lane-dense 128-wide ----
    out = jnp.dot(h.astype(bf16), whead_ref[...],
                  preferred_element_type=f32) + bhead_ref[...]    # (NB, 128)
    for b in range(B):
        o_ref[b, :, :] = out[b * P:(b + 1) * P, :].astype(o_ref.dtype)


def _is_two_core_chip():
    """True on v7x-class chips (2 TensorCores); conservative otherwise."""
    try:
        kind = jax.devices()[0].device_kind.lower()
    except Exception:
        return False
    return ("v7" in kind) or ("7x" in kind)


def reward_induced_rep_forward(x, packed, pred_step):
    B, T, R, _ = x.shape
    P = pred_step
    H = packed["w_hh"].shape[0]
    n_conv = len(packed["conv"])
    HEADW = packed["w_head"].shape[1]          # 128 (lane-dense padded output)

    # Batch-split grid only where a second TensorCore exists; a grid of 1 on
    # v5e/v6e keeps the recurrence unserialized and weights DMA'd once.
    G = 2 if (_is_two_core_chip() and B % 2 == 0) else 1
    B_local = B // G

    x2 = x.reshape(B * T, R * R)               # raw row-major pixels

    operands = [x2]
    for w, b in packed["conv"]:
        operands += [w, b]
    operands += [packed["w_in"], packed["u_bias"], packed["w_hh"],
                 packed["b_lstm"], packed["w_head"], packed["b_head"]]

    def _rep(arr):                              # weight replicated across grid
        nd = arr.ndim
        return pl.BlockSpec(arr.shape, lambda g, _nd=nd: (0,) * _nd)

    in_specs = [pl.BlockSpec((B_local * T, R * R), lambda g: (g, 0))]
    in_specs += [_rep(op) for op in operands[1:]]
    out_spec = pl.BlockSpec((B_local, P, HEADW), lambda g: (g, 0, 0))

    # Advisory cost estimate for XLA's scheduler around this tiny custom call.
    flops = 0
    M = B * T
    for w, _b in packed["conv"]:
        flops += 2 * M * int(w.shape[0]) * int(w.shape[1])
    flops += 2 * M * int(packed["w_in"].shape[0]) * int(packed["w_in"].shape[1])
    flops += 2 * T * (B * P) * H * 4 * H       # recurrence h @ w_hh
    flops += 2 * (B * P) * H * HEADW           # folded heads
    transcendentals = T * (B * P) * 5 * H      # 3 sigmoid + 2 tanh per step/elem
    bytes_accessed = sum(int(op.size) * op.dtype.itemsize for op in operands)
    bytes_accessed += B * P * HEADW * 4

    kernel = functools.partial(_fused_forward_kernel,
                               n_conv=n_conv, B=B_local, T=T, P=P, H=H)
    out = pl.pallas_call(
        kernel,
        out_shape=jax.ShapeDtypeStruct((B, P, HEADW), jnp.float32),
        grid=(G,),
        in_specs=in_specs,
        out_specs=out_spec,
        compiler_params=pltpu.CompilerParams(dimension_semantics=("parallel",)),
        cost_estimate=pl.CostEstimate(flops=flops,
                                      transcendentals=transcendentals,
                                      bytes_accessed=bytes_accessed),
    )(*operands)
    # Lane-dense output: columns 0..3 are the 4 heads -> module output (B, 4, P).
    return jnp.transpose(out[:, :, :4], (0, 2, 1))


# ----------------------------------------------------------------------------
# Parameter init (PyTorch layout) and pure-JAX reference for sanity checking
# ----------------------------------------------------------------------------
def init_params(key, resolution, pred_step, hidden=128, fc_dim=64):
    ks = iter(jax.random.split(key, 32))
    conv = []
    in_ch, out_ch, r = 1, 4, resolution
    while r > 1:
        w = 0.3 * jax.random.normal(next(ks), (out_ch, in_ch, 2, 2), jnp.float32)
        b = 0.05 * jax.random.normal(next(ks), (out_ch,), jnp.float32)
        conv.append((w, b))
        in_ch, out_ch, r = out_ch, out_ch * 2, r // 2
    feat_dim = in_ch
    fc_w = 0.2 * jax.random.normal(next(ks), (feat_dim, fc_dim), jnp.float32)
    fc_b = 0.05 * jax.random.normal(next(ks), (fc_dim,), jnp.float32)
    w_ih = 0.1 * jax.random.normal(next(ks), (fc_dim, 4 * hidden), jnp.float32)
    w_hh = 0.1 * jax.random.normal(next(ks), (hidden, 4 * hidden), jnp.float32)
    b_lstm = 0.05 * jax.random.normal(next(ks), (4 * hidden,), jnp.float32)
    hw1 = 0.1 * jax.random.normal(next(ks), (4, hidden, 32), jnp.float32)
    hb1 = 0.05 * jax.random.normal(next(ks), (4, 32), jnp.float32)
    hw2 = 0.1 * jax.random.normal(next(ks), (4, 32, 1), jnp.float32)
    hb2 = 0.05 * jax.random.normal(next(ks), (4, 1), jnp.float32)
    return dict(conv=conv, fc_w=fc_w, fc_b=fc_b, w_ih=w_ih, w_hh=w_hh,
                b_lstm=b_lstm, hw1=hw1, hb1=hb1, hw2=hw2, hb2=hb2,
                pred_step=pred_step, feat_dim=feat_dim)


def reference_forward(x, params):
    B, T, R, _ = x.shape
    out = x.reshape(B * T, 1, R, R)
    for (w, b) in params["conv"]:
        out = lax.conv_general_dilated(out, w, (2, 2), "VALID",
                                       dimension_numbers=("NCHW", "OIHW", "NCHW"))
        out = jnp.maximum(out + b[None, :, None, None], 0.0)
    feat = out.reshape(B * T, -1)
    fc = (feat @ params["fc_w"] + params["fc_b"]).reshape(B, T, -1)

    H = params["w_hh"].shape[0]

    def lstm_last_hidden(xs):  # xs: (N, T, D)
        N = xs.shape[0]
        h = jnp.zeros((N, H), jnp.float32)
        c = jnp.zeros((N, H), jnp.float32)
        for t in range(xs.shape[1]):
            z = xs[:, t, :] @ params["w_ih"] + h @ params["w_hh"] + params["b_lstm"]
            i = jax.nn.sigmoid(z[:, :H])
            f = jax.nn.sigmoid(z[:, H:2 * H])
            g = jnp.tanh(z[:, 2 * H:3 * H])
            o = jax.nn.sigmoid(z[:, 3 * H:])
            c = f * c + i * g
            h = o * jnp.tanh(c)
        return h

    P = params["pred_step"]
    steps = []
    for i in range(P):
        if i == 0:
            seq = fc
        else:
            pad = jnp.zeros((B, i, fc.shape[2]), fc.dtype)
            seq = jnp.concatenate([fc[:, i:, :], pad], axis=1)
        steps.append(lstm_last_hidden(seq))          # (B, H)
    lstm_out = jnp.stack(steps, axis=1)              # (B, P, H)

    head_outs = []
    for h in range(4):
        hid = lstm_out @ params["hw1"][h] + params["hb1"][h]
        head_outs.append(hid @ params["hw2"][h] + params["hb2"][h])  # (B, P, 1)
    final = jnp.stack(head_outs, axis=0)             # (4, B, P, 1)
    return jnp.squeeze(jnp.transpose(final, (1, 0, 2, 3)), 3)  # (B, 4, P)


if __name__ == "__main__":
    key = jax.random.PRNGKey(0)
    B, T, R, P, H = 2, 8, 16, 4, 128   # batch, seq, resolution, pred steps, lstm hidden
    params = init_params(key, resolution=R, pred_step=P, hidden=H)
    packed = pack_params(params)
    x = jax.random.normal(jax.random.fold_in(key, 123), (B, T, R, R), jnp.float32)

    fwd = jax.jit(functools.partial(reward_induced_rep_forward, pred_step=P))
    out = jax.block_until_ready(fwd(x, packed))
    assert out.shape == (B, 4, P), out.shape

    ref = jax.block_until_ready(reference_forward(x, params))
    # bf16 MXU operands (per perf review) => bf16-class tolerance vs f32 reference.
    max_err = float(jnp.max(jnp.abs(out - ref)))
    assert jnp.allclose(out, ref, rtol=5e-2, atol=5e-3), max_err

    print("KERNEL_OK")
</pallas_src>

<mosaic_0001>
module attributes {stable_mosaic.version = 11 : i64} {
  func.func @_fused_forward_kernel(%arg0: i32, %arg1: memref<16x256xf32, #tpu.memory_space<vmem>>, %arg2: memref<256x256xbf16, #tpu.memory_space<vmem>>, %arg3: memref<1x256xf32, #tpu.memory_space<vmem>>, %arg4: memref<256x128xbf16, #tpu.memory_space<vmem>>, %arg5: memref<1x128xf32, #tpu.memory_space<vmem>>, %arg6: memref<128x64xbf16, #tpu.memory_space<vmem>>, %arg7: memref<1x64xf32, #tpu.memory_space<vmem>>, %arg8: memref<64x32xbf16, #tpu.memory_space<vmem>>, %arg9: memref<1x32xf32, #tpu.memory_space<vmem>>, %arg10: memref<32x512xbf16, #tpu.memory_space<vmem>>, %arg11: memref<1x512xf32, #tpu.memory_space<vmem>>, %arg12: memref<128x512xbf16, #tpu.memory_space<vmem>>, %arg13: memref<1x512xf32, #tpu.memory_space<vmem>>, %arg14: memref<128x128xbf16, #tpu.memory_space<vmem>>, %arg15: memref<1x128xf32, #tpu.memory_space<vmem>>, %arg16: memref<2x4x128xf32, #tpu.memory_space<vmem>>) attributes {dimension_semantics = [#tpu.dimension_semantics<parallel>], iteration_bounds = array<i64: 1>, scalar_prefetch = 0 : i64, scratch_operands = 0 : i64, tpu.core_type = #tpu.core_type<tc>, window_params = [{transform_indices = @transform_0, window_bounds = array<i64: 16, 256>}, {pipeline_mode = #tpu.pipeline_mode<synchronous>, transform_indices = @transform_1, window_bounds = array<i64: 256, 256>}, {pipeline_mode = #tpu.pipeline_mode<synchronous>, transform_indices = @transform_2, window_bounds = array<i64: 1, 256>}, {pipeline_mode = #tpu.pipeline_mode<synchronous>, transform_indices = @transform_3, window_bounds = array<i64: 256, 128>}, {pipeline_mode = #tpu.pipeline_mode<synchronous>, transform_indices = @transform_4, window_bounds = array<i64: 1, 128>}, {pipeline_mode = #tpu.pipeline_mode<synchronous>, transform_indices = @transform_5, window_bounds = array<i64: 128, 64>}, {pipeline_mode = #tpu.pipeline_mode<synchronous>, transform_indices = @transform_6, window_bounds = array<i64: 1, 64>}, {pipeline_mode = #tpu.pipeline_mode<synchronous>, transform_indices = @transform_7, window_bounds = array<i64: 64, 32>}, {pipeline_mode = #tpu.pipeline_mode<synchronous>, transform_indices = @transform_8, window_bounds = array<i64: 1, 32>}, {pipeline_mode = #tpu.pipeline_mode<synchronous>, transform_indices = @transform_9, window_bounds = array<i64: 32, 512>}, {pipeline_mode = #tpu.pipeline_mode<synchronous>, transform_indices = @transform_10, window_bounds = array<i64: 1, 512>}, {pipeline_mode = #tpu.pipeline_mode<synchronous>, transform_indices = @transform_11, window_bounds = array<i64: 128, 512>}, {pipeline_mode = #tpu.pipeline_mode<synchronous>, transform_indices = @transform_12, window_bounds = array<i64: 1, 512>}, {pipeline_mode = #tpu.pipeline_mode<synchronous>, transform_indices = @transform_13, window_bounds = array<i64: 128, 128>}, {pipeline_mode = #tpu.pipeline_mode<synchronous>, transform_indices = @transform_14, window_bounds = array<i64: 1, 128>}, {transform_indices = @transform_15, window_bounds = array<i64: 2, 4, 128>}]} {
    %c0 = arith.constant 0 : index
    %c0_0 = arith.constant 0 : index
    %0 = vector.load %arg1[%c0, %c0_0] : memref<16x256xf32, #tpu.memory_space<vmem>>, vector<16x256xf32>
    %1 = arith.truncf %0 : vector<16x256xf32> to vector<16x256xbf16>
    %c0_1 = arith.constant 0 : index
    %c0_2 = arith.constant 0 : index
    %2 = vector.load %arg2[%c0_1, %c0_2] : memref<256x256xbf16, #tpu.memory_space<vmem>>, vector<256x256xbf16>
    %cst = arith.constant dense<0.000000e+00> : vector<16x256xf32>
    %3 = tpu.matmul %1, %2, %cst {dimension_numbers = #tpu.dot_dimension_numbers<[1], [0], [0], [1], [0, 0, 1, 1], [], []>} : vector<16x256xbf16>, vector<256x256xbf16>, vector<16x256xf32> -> vector<16x256xf32>
    %c0_3 = arith.constant 0 : index
    %c0_4 = arith.constant 0 : index
    %4 = vector.load %arg3[%c0_3, %c0_4] : memref<1x256xf32, #tpu.memory_space<vmem>>, vector<1x256xf32>
    %5 = vector.broadcast %4 : vector<1x256xf32> to vector<16x256xf32>
    %6 = arith.addf %3, %5 : vector<16x256xf32>
    %cst_5 = arith.constant 0.000000e+00 : f32
    %7 = vector.broadcast %cst_5 : f32 to vector<16x256xf32>
    %8 = arith.maximumf %6, %7 : vector<16x256xf32>
    %9 = arith.truncf %8 : vector<16x256xf32> to vector<16x256xbf16>
    %c0_6 = arith.constant 0 : index
    %c0_7 = arith.constant 0 : index
    %10 = vector.load %arg4[%c0_6, %c0_7] : memref<256x128xbf16, #tpu.memory_space<vmem>>, vector<256x128xbf16>
    %cst_8 = arith.constant dense<0.000000e+00> : vector<16x128xf32>
    %11 = tpu.matmul %9, %10, %cst_8 {dimension_numbers = #tpu.dot_dimension_numbers<[1], [0], [0], [1], [0, 0, 1, 1], [], []>} : vector<16x256xbf16>, vector<256x128xbf16>, vector<16x128xf32> -> vector<16x128xf32>
    %c0_9 = arith.constant 0 : index
    %c0_10 = arith.constant 0 : index
    %12 = vector.load %arg5[%c0_9, %c0_10] : memref<1x128xf32, #tpu.memory_space<vmem>>, vector<1x128xf32>
    %13 = vector.broadcast %12 : vector<1x128xf32> to vector<16x128xf32>
    %14 = arith.addf %11, %13 : vector<16x128xf32>
    %cst_11 = arith.constant 0.000000e+00 : f32
    %15 = vector.broadcast %cst_11 : f32 to vector<16x128xf32>
    %16 = arith.maximumf %14, %15 : vector<16x128xf32>
    %17 = arith.truncf %16 : vector<16x128xf32> to vector<16x128xbf16>
    %c0_12 = arith.constant 0 : index
    %c0_13 = arith.constant 0 : index
    %18 = vector.load %arg6[%c0_12, %c0_13] : memref<128x64xbf16, #tpu.memory_space<vmem>>, vector<128x64xbf16>
    %cst_14 = arith.constant dense<0.000000e+00> : vector<16x64xf32>
    %19 = tpu.matmul %17, %18, %cst_14 {dimension_numbers = #tpu.dot_dimension_numbers<[1], [0], [0], [1], [0, 0, 1, 1], [], []>} : vector<16x128xbf16>, vector<128x64xbf16>, vector<16x64xf32> -> vector<16x64xf32>
    %c0_15 = arith.constant 0 : index
    %c0_16 = arith.constant 0 : index
    %20 = vector.load %arg7[%c0_15, %c0_16] : memref<1x64xf32, #tpu.memory_space<vmem>>, vector<1x64xf32>
    %21 = vector.broadcast %20 : vector<1x64xf32> to vector<16x64xf32>
    %22 = arith.addf %19, %21 : vector<16x64xf32>
    %cst_17 = arith.constant 0.000000e+00 : f32
    %23 = vector.broadcast %cst_17 : f32 to vector<16x64xf32>
    %24 = arith.maximumf %22, %23 : vector<16x64xf32>
    %25 = arith.truncf %24 : vector<16x64xf32> to vector<16x64xbf16>
    %c0_18 = arith.constant 0 : index
    %c0_19 = arith.constant 0 : index
    %26 = vector.load %arg8[%c0_18, %c0_19] : memref<64x32xbf16, #tpu.memory_space<vmem>>, vector<64x32xbf16>
    %cst_20 = arith.constant dense<0.000000e+00> : vector<16x32xf32>
    %27 = tpu.matmul %25, %26, %cst_20 {dimension_numbers = #tpu.dot_dimension_numbers<[1], [0], [0], [1], [0, 0, 1, 1], [], []>} : vector<16x64xbf16>, vector<64x32xbf16>, vector<16x32xf32> -> vector<16x32xf32>
    %c0_21 = arith.constant 0 : index
    %c0_22 = arith.constant 0 : index
    %28 = vector.load %arg9[%c0_21, %c0_22] : memref<1x32xf32, #tpu.memory_space<vmem>>, vector<1x32xf32>
    %29 = vector.broadcast %28 : vector<1x32xf32> to vector<16x32xf32>
    %30 = arith.addf %27, %29 : vector<16x32xf32>
    %cst_23 = arith.constant 0.000000e+00 : f32
    %31 = vector.broadcast %cst_23 : f32 to vector<16x32xf32>
    %32 = arith.maximumf %30, %31 : vector<16x32xf32>
    %33 = arith.truncf %32 : vector<16x32xf32> to vector<16x32xbf16>
    %c0_24 = arith.constant 0 : index
    %c0_25 = arith.constant 0 : index
    %34 = vector.load %arg10[%c0_24, %c0_25] : memref<32x512xbf16, #tpu.memory_space<vmem>>, vector<32x512xbf16>
    %cst_26 = arith.constant dense<0.000000e+00> : vector<16x512xf32>
    %35 = tpu.matmul %33, %34, %cst_26 {dimension_numbers = #tpu.dot_dimension_numbers<[1], [0], [0], [1], [0, 0, 1, 1], [], []>} : vector<16x32xbf16>, vector<32x512xbf16>, vector<16x512xf32> -> vector<16x512xf32>
    %c0_27 = arith.constant 0 : index
    %c0_28 = arith.constant 0 : index
    %36 = vector.load %arg11[%c0_27, %c0_28] : memref<1x512xf32, #tpu.memory_space<vmem>>, vector<1x512xf32>
    %37 = vector.broadcast %36 : vector<1x512xf32> to vector<16x512xf32>
    %38 = arith.addf %35, %37 : vector<16x512xf32>
    %c0_29 = arith.constant 0 : index
    %c0_30 = arith.constant 0 : index
    %39 = vector.load %arg13[%c0_29, %c0_30] : memref<1x512xf32, #tpu.memory_space<vmem>>, vector<1x512xf32>
    %40 = vector.shape_cast %39 : vector<1x512xf32> to vector<1x512xf32>
    %41 = vector.broadcast %40 : vector<1x512xf32> to vector<3x512xf32>
    %c0_31 = arith.constant 0 : index
    %c0_32 = arith.constant 0 : index
    %42 = vector.load %arg12[%c0_31, %c0_32] : memref<128x512xbf16, #tpu.memory_space<vmem>>, vector<128x512xbf16>
    %cst_33 = arith.constant 0.000000e+00 : f32
    %43 = vector.broadcast %cst_33 : f32 to vector<8x128xf32>
    %cst_34 = arith.constant 0.000000e+00 : f32
    %44 = vector.broadcast %cst_34 : f32 to vector<8x128xf32>
    %45 = vector.extract_strided_slice %38 {offsets = [0, 0], sizes = [4, 512], strides = [1, 1]} : vector<16x512xf32> to vector<4x512xf32>
    %46 = vector.extract_strided_slice %38 {offsets = [8, 0], sizes = [4, 512], strides = [1, 1]} : vector<16x512xf32> to vector<4x512xf32>
    %47 = tpu.concatenate %45, %46 in 0 : vector<4x512xf32>, vector<4x512xf32> -> vector<8x512xf32>
    %48 = arith.truncf %43 : vector<8x128xf32> to vector<8x128xbf16>
    %cst_35 = arith.constant dense<0.000000e+00> : vector<8x512xf32>
    %49 = tpu.matmul %48, %42, %cst_35 {dimension_numbers = #tpu.dot_dimension_numbers<[1], [0], [0], [1], [0, 0, 1, 1], [], []>} : vector<8x128xbf16>, vector<128x512xbf16>, vector<8x512xf32> -> vector<8x512xf32>
    %50 = arith.addf %47, %49 : vector<8x512xf32>
    %51 = vector.extract_strided_slice %50 {offsets = [0, 0], sizes = [8, 128], strides = [1, 1]} : vector<8x512xf32> to vector<8x128xf32>
    %52 = arith.negf %51 : vector<8x128xf32>
    %53 = math.exp %52 : vector<8x128xf32>
    %cst_36 = arith.constant 1.000000e+00 : f32
    %54 = vector.broadcast %cst_36 : f32 to vector<8x128xf32>
    %55 = arith.addf %54, %53 : vector<8x128xf32>
    %56 = arith.divf %54, %55 : vector<8x128xf32>
    %57 = vector.extract_strided_slice %50 {offsets = [0, 128], sizes = [8, 128], strides = [1, 1]} : vector<8x512xf32> to vector<8x128xf32>
    %58 = arith.negf %57 : vector<8x128xf32>
    %59 = math.exp %58 : vector<8x128xf32>
    %cst_37 = arith.constant 1.000000e+00 : f32
    %60 = vector.broadcast %cst_37 : f32 to vector<8x128xf32>
    %61 = arith.addf %60, %59 : vector<8x128xf32>
    %62 = arith.divf %60, %61 : vector<8x128xf32>
    %63 = vector.extract_strided_slice %50 {offsets = [0, 256], sizes = [8, 128], strides = [1, 1]} : vector<8x512xf32> to vector<8x128xf32>
    %64 = math.tanh %63 : vector<8x128xf32>
    %65 = vector.extract_strided_slice %50 {offsets = [0, 384], sizes = [8, 128], strides = [1, 1]} : vector<8x512xf32> to vector<8x128xf32>
    %66 = arith.negf %65 : vector<8x128xf32>
    %67 = math.exp %66 : vector<8x128xf32>
    %cst_38 = arith.constant 1.000000e+00 : f32
    %68 = vector.broadcast %cst_38 : f32 to vector<8x128xf32>
    %69 = arith.addf %68, %67 : vector<8x128xf32>
    %70 = arith.divf %68, %69 : vector<8x128xf32>
    %71 = arith.mulf %62, %44 : vector<8x128xf32>
    %72 = arith.mulf %56, %64 : vector<8x128xf32>
    %73 = arith.addf %71, %72 : vector<8x128xf32>
    %74 = math.tanh %73 : vector<8x128xf32>
    %75 = arith.mulf %70, %74 : vector<8x128xf32>
    %76 = vector.extract_strided_slice %38 {offsets = [1, 0], sizes = [4, 512], strides = [1, 1]} : vector<16x512xf32> to vector<4x512xf32>
    %77 = vector.extract_strided_slice %38 {offsets = [9, 0], sizes = [4, 512], strides = [1, 1]} : vector<16x512xf32> to vector<4x512xf32>
    %78 = tpu.concatenate %76, %77 in 0 : vector<4x512xf32>, vector<4x512xf32> -> vector<8x512xf32>
    %79 = arith.truncf %75 : vector<8x128xf32> to vector<8x128xbf16>
    %cst_39 = arith.constant dense<0.000000e+00> : vector<8x512xf32>
    %80 = tpu.matmul %79, %42, %cst_39 {dimension_numbers = #tpu.dot_dimension_numbers<[1], [0], [0], [1], [0, 0, 1, 1], [], []>} : vector<8x128xbf16>, vector<128x512xbf16>, vector<8x512xf32> -> vector<8x512xf32>
    %81 = arith.addf %78, %80 : vector<8x512xf32>
    %82 = vector.extract_strided_slice %81 {offsets = [0, 0], sizes = [8, 128], strides = [1, 1]} : vector<8x512xf32> to vector<8x128xf32>
    %83 = arith.negf %82 : vector<8x128xf32>
    %84 = math.exp %83 : vector<8x128xf32>
    %cst_40 = arith.constant 1.000000e+00 : f32
    %85 = vector.broadcast %cst_40 : f32 to vector<8x128xf32>
    %86 = arith.addf %85, %84 : vector<8x128xf32>
    %87 = arith.divf %85, %86 : vector<8x128xf32>
    %88 = vector.extract_strided_slice %81 {offsets = [0, 128], sizes = [8, 128], strides = [1, 1]} : vector<8x512xf32> to vector<8x128xf32>
    %89 = arith.negf %88 : vector<8x128xf32>
    %90 = math.exp %89 : vector<8x128xf32>
    %cst_41 = arith.constant 1.000000e+00 : f32
    %91 = vector.broadcast %cst_41 : f32 to vector<8x128xf32>
    %92 = arith.addf %91, %90 : vector<8x128xf32>
    %93 = arith.divf %91, %92 : vector<8x128xf32>
    %94 = vector.extract_strided_slice %81 {offsets = [0, 256], sizes = [8, 128], strides = [1, 1]} : vector<8x512xf32> to vector<8x128xf32>
    %95 = math.tanh %94 : vector<8x128xf32>
    %96 = vector.extract_strided_slice %81 {offsets = [0, 384], sizes = [8, 128], strides = [1, 1]} : vector<8x512xf32> to vector<8x128xf32>
    %97 = arith.negf %96 : vector<8x128xf32>
    %98 = math.exp %97 : vector<8x128xf32>
    %cst_42 = arith.constant 1.000000e+00 : f32
    %99 = vector.broadcast %cst_42 : f32 to vector<8x128xf32>
    %100 = arith.addf %99, %98 : vector<8x128xf32>
    %101 = arith.divf %99, %100 : vector<8x128xf32>
    %102 = arith.mulf %93, %73 : vector<8x128xf32>
    %103 = arith.mulf %87, %95 : vector<8x128xf32>
    %104 = arith.addf %102, %103 : vector<8x128xf32>
    %105 = math.tanh %104 : vector<8x128xf32>
    %106 = arith.mulf %101, %105 : vector<8x128xf32>
    %107 = vector.extract_strided_slice %38 {offsets = [2, 0], sizes = [4, 512], strides = [1, 1]} : vector<16x512xf32> to vector<4x512xf32>
    %108 = vector.extract_strided_slice %38 {offsets = [10, 0], sizes = [4, 512], strides = [1, 1]} : vector<16x512xf32> to vector<4x512xf32>
    %109 = tpu.concatenate %107, %108 in 0 : vector<4x512xf32>, vector<4x512xf32> -> vector<8x512xf32>
    %110 = arith.truncf %106 : vector<8x128xf32> to vector<8x128xbf16>
    %cst_43 = arith.constant dense<0.000000e+00> : vector<8x512xf32>
    %111 = tpu.matmul %110, %42, %cst_43 {dimension_numbers = #tpu.dot_dimension_numbers<[1], [0], [0], [1], [0, 0, 1, 1], [], []>} : vector<8x128xbf16>, vector<128x512xbf16>, vector<8x512xf32> -> vector<8x512xf32>
    %112 = arith.addf %109, %111 : vector<8x512xf32>
    %113 = vector.extract_strided_slice %112 {offsets = [0, 0], sizes = [8, 128], strides = [1, 1]} : vector<8x512xf32> to vector<8x128xf32>
    %114 = arith.negf %113 : vector<8x128xf32>
    %115 = math.exp %114 : vector<8x128xf32>
    %cst_44 = arith.constant 1.000000e+00 : f32
    %116 = vector.broadcast %cst_44 : f32 to vector<8x128xf32>
    %117 = arith.addf %116, %115 : vector<8x128xf32>
    %118 = arith.divf %116, %117 : vector<8x128xf32>
    %119 = vector.extract_strided_slice %112 {offsets = [0, 128], sizes = [8, 128], strides = [1, 1]} : vector<8x512xf32> to vector<8x128xf32>
    %120 = arith.negf %119 : vector<8x128xf32>
    %121 = math.exp %120 : vector<8x128xf32>
    %cst_45 = arith.constant 1.000000e+00 : f32
    %122 = vector.broadcast %cst_45 : f32 to vector<8x128xf32>
    %123 = arith.addf %122, %121 : vector<8x128xf32>
    %124 = arith.divf %122, %123 : vector<8x128xf32>
    %125 = vector.extract_strided_slice %112 {offsets = [0, 256], sizes = [8, 128], strides = [1, 1]} : vector<8x512xf32> to vector<8x128xf32>
    %126 = math.tanh %125 : vector<8x128xf32>
    %127 = vector.extract_strided_slice %112 {offsets = [0, 384], sizes = [8, 128], strides = [1, 1]} : vector<8x512xf32> to vector<8x128xf32>
    %128 = arith.negf %127 : vector<8x128xf32>
    %129 = math.exp %128 : vector<8x128xf32>
    %cst_46 = arith.constant 1.000000e+00 : f32
    %130 = vector.broadcast %cst_46 : f32 to vector<8x128xf32>
    %131 = arith.addf %130, %129 : vector<8x128xf32>
    %132 = arith.divf %130, %131 : vector<8x128xf32>
    %133 = arith.mulf %124, %104 : vector<8x128xf32>
    %134 = arith.mulf %118, %126 : vector<8x128xf32>
    %135 = arith.addf %133, %134 : vector<8x128xf32>
    %136 = math.tanh %135 : vector<8x128xf32>
    %137 = arith.mulf %132, %136 : vector<8x128xf32>
    %138 = vector.extract_strided_slice %38 {offsets = [3, 0], sizes = [4, 512], strides = [1, 1]} : vector<16x512xf32> to vector<4x512xf32>
    %139 = vector.extract_strided_slice %38 {offsets = [11, 0], sizes = [4, 512], strides = [1, 1]} : vector<16x512xf32> to vector<4x512xf32>
    %140 = tpu.concatenate %138, %139 in 0 : vector<4x512xf32>, vector<4x512xf32> -> vector<8x512xf32>
    %141 = arith.truncf %137 : vector<8x128xf32> to vector<8x128xbf16>
    %cst_47 = arith.constant dense<0.000000e+00> : vector<8x512xf32>
    %142 = tpu.matmul %141, %42, %cst_47 {dimension_numbers = #tpu.dot_dimension_numbers<[1], [0], [0], [1], [0, 0, 1, 1], [], []>} : vector<8x128xbf16>, vector<128x512xbf16>, vector<8x512xf32> -> vector<8x512xf32>
    %143 = arith.addf %140, %142 : vector<8x512xf32>
    %144 = vector.extract_strided_slice %143 {offsets = [0, 0], sizes = [8, 128], strides = [1, 1]} : vector<8x512xf32> to vector<8x128xf32>
    %145 = arith.negf %144 : vector<8x128xf32>
    %146 = math.exp %145 : vector<8x128xf32>
    %cst_48 = arith.constant 1.000000e+00 : f32
    %147 = vector.broadcast %cst_48 : f32 to vector<8x128xf32>
    %148 = arith.addf %147, %146 : vector<8x128xf32>
    %149 = arith.divf %147, %148 : vector<8x128xf32>
    %150 = vector.extract_strided_slice %143 {offsets = [0, 128], sizes = [8, 128], strides = [1, 1]} : vector<8x512xf32> to vector<8x128xf32>
    %151 = arith.negf %150 : vector<8x128xf32>
    %152 = math.exp %151 : vector<8x128xf32>
    %cst_49 = arith.constant 1.000000e+00 : f32
    %153 = vector.broadcast %cst_49 : f32 to vector<8x128xf32>
    %154 = arith.addf %153, %152 : vector<8x128xf32>
    %155 = arith.divf %153, %154 : vector<8x128xf32>
    %156 = vector.extract_strided_slice %143 {offsets = [0, 256], sizes = [8, 128], strides = [1, 1]} : vector<8x512xf32> to vector<8x128xf32>
    %157 = math.tanh %156 : vector<8x128xf32>
    %158 = vector.extract_strided_slice %143 {offsets = [0, 384], sizes = [8, 128], strides = [1, 1]} : vector<8x512xf32> to vector<8x128xf32>
    %159 = arith.negf %158 : vector<8x128xf32>
    %160 = math.exp %159 : vector<8x128xf32>
    %cst_50 = arith.constant 1.000000e+00 : f32
    %161 = vector.broadcast %cst_50 : f32 to vector<8x128xf32>
    %162 = arith.addf %161, %160 : vector<8x128xf32>
    %163 = arith.divf %161, %162 : vector<8x128xf32>
    %164 = arith.mulf %155, %135 : vector<8x128xf32>
    %165 = arith.mulf %149, %157 : vector<8x128xf32>
    %166 = arith.addf %164, %165 : vector<8x128xf32>
    %167 = math.tanh %166 : vector<8x128xf32>
    %168 = arith.mulf %163, %167 : vector<8x128xf32>
    %169 = vector.extract_strided_slice %38 {offsets = [4, 0], sizes = [4, 512], strides = [1, 1]} : vector<16x512xf32> to vector<4x512xf32>
    %170 = vector.extract_strided_slice %38 {offsets = [12, 0], sizes = [4, 512], strides = [1, 1]} : vector<16x512xf32> to vector<4x512xf32>
    %171 = tpu.concatenate %169, %170 in 0 : vector<4x512xf32>, vector<4x512xf32> -> vector<8x512xf32>
    %172 = arith.truncf %168 : vector<8x128xf32> to vector<8x128xbf16>
    %cst_51 = arith.constant dense<0.000000e+00> : vector<8x512xf32>
    %173 = tpu.matmul %172, %42, %cst_51 {dimension_numbers = #tpu.dot_dimension_numbers<[1], [0], [0], [1], [0, 0, 1, 1], [], []>} : vector<8x128xbf16>, vector<128x512xbf16>, vector<8x512xf32> -> vector<8x512xf32>
    %174 = arith.addf %171, %173 : vector<8x512xf32>
    %175 = vector.extract_strided_slice %174 {offsets = [0, 0], sizes = [8, 128], strides = [1, 1]} : vector<8x512xf32> to vector<8x128xf32>
    %176 = arith.negf %175 : vector<8x128xf32>
    %177 = math.exp %176 : vector<8x128xf32>
    %cst_52 = arith.constant 1.000000e+00 : f32
    %178 = vector.broadcast %cst_52 : f32 to vector<8x128xf32>
    %179 = arith.addf %178, %177 : vector<8x128xf32>
    %180 = arith.divf %178, %179 : vector<8x128xf32>
    %181 = vector.extract_strided_slice %174 {offsets = [0, 128], sizes = [8, 128], strides = [1, 1]} : vector<8x512xf32> to vector<8x128xf32>
    %182 = arith.negf %181 : vector<8x128xf32>
    %183 = math.exp %182 : vector<8x128xf32>
    %cst_53 = arith.constant 1.000000e+00 : f32
    %184 = vector.broadcast %cst_53 : f32 to vector<8x128xf32>
    %185 = arith.addf %184, %183 : vector<8x128xf32>
    %186 = arith.divf %184, %185 : vector<8x128xf32>
    %187 = vector.extract_strided_slice %174 {offsets = [0, 256], sizes = [8, 128], strides = [1, 1]} : vector<8x512xf32> to vector<8x128xf32>
    %188 = math.tanh %187 : vector<8x128xf32>
    %189 = vector.extract_strided_slice %174 {offsets = [0, 384], sizes = [8, 128], strides = [1, 1]} : vector<8x512xf32> to vector<8x128xf32>
    %190 = arith.negf %189 : vector<8x128xf32>
    %191 = math.exp %190 : vector<8x128xf32>
    %cst_54 = arith.constant 1.000000e+00 : f32
    %192 = vector.broadcast %cst_54 : f32 to vector<8x128xf32>
    %193 = arith.addf %192, %191 : vector<8x128xf32>
    %194 = arith.divf %192, %193 : vector<8x128xf32>
    %195 = arith.mulf %186, %166 : vector<8x128xf32>
    %196 = arith.mulf %180, %188 : vector<8x128xf32>
    %197 = arith.addf %195, %196 : vector<8x128xf32>
    %198 = math.tanh %197 : vector<8x128xf32>
    %199 = arith.mulf %194, %198 : vector<8x128xf32>
    %200 = vector.extract_strided_slice %38 {offsets = [5, 0], sizes = [3, 512], strides = [1, 1]} : vector<16x512xf32> to vector<3x512xf32>
    %201 = vector.extract_strided_slice %41 {offsets = [0, 0], sizes = [1, 512], strides = [1, 1]} : vector<3x512xf32> to vector<1x512xf32>
    %202 = vector.extract_strided_slice %38 {offsets = [13, 0], sizes = [3, 512], strides = [1, 1]} : vector<16x512xf32> to vector<3x512xf32>
    %203 = vector.extract_strided_slice %41 {offsets = [0, 0], sizes = [1, 512], strides = [1, 1]} : vector<3x512xf32> to vector<1x512xf32>
    %204 = tpu.concatenate %200, %201, %202, %203 in 0 : vector<3x512xf32>, vector<1x512xf32>, vector<3x512xf32>, vector<1x512xf32> -> vector<8x512xf32>
    %205 = arith.truncf %199 : vector<8x128xf32> to vector<8x128xbf16>
    %cst_55 = arith.constant dense<0.000000e+00> : vector<8x512xf32>
    %206 = tpu.matmul %205, %42, %cst_55 {dimension_numbers = #tpu.dot_dimension_numbers<[1], [0], [0], [1], [0, 0, 1, 1], [], []>} : vector<8x128xbf16>, vector<128x512xbf16>, vector<8x512xf32> -> vector<8x512xf32>
    %207 = arith.addf %204, %206 : vector<8x512xf32>
    %208 = vector.extract_strided_slice %207 {offsets = [0, 0], sizes = [8, 128], strides = [1, 1]} : vector<8x512xf32> to vector<8x128xf32>
    %209 = arith.negf %208 : vector<8x128xf32>
    %210 = math.exp %209 : vector<8x128xf32>
    %cst_56 = arith.constant 1.000000e+00 : f32
    %211 = vector.broadcast %cst_56 : f32 to vector<8x128xf32>
    %212 = arith.addf %211, %210 : vector<8x128xf32>
    %213 = arith.divf %211, %212 : vector<8x128xf32>
    %214 = vector.extract_strided_slice %207 {offsets = [0, 128], sizes = [8, 128], strides = [1, 1]} : vector<8x512xf32> to vector<8x128xf32>
    %215 = arith.negf %214 : vector<8x128xf32>
    %216 = math.exp %215 : vector<8x128xf32>
    %cst_57 = arith.constant 1.000000e+00 : f32
    %217 = vector.broadcast %cst_57 : f32 to vector<8x128xf32>
    %218 = arith.addf %217, %216 : vector<8x128xf32>
    %219 = arith.divf %217, %218 : vector<8x128xf32>
    %220 = vector.extract_strided_slice %207 {offsets = [0, 256], sizes = [8, 128], strides = [1, 1]} : vector<8x512xf32> to vector<8x128xf32>
    %221 = math.tanh %220 : vector<8x128xf32>
    %222 = vector.extract_strided_slice %207 {offsets = [0, 384], sizes = [8, 128], strides = [1, 1]} : vector<8x512xf32> to vector<8x128xf32>
    %223 = arith.negf %222 : vector<8x128xf32>
    %224 = math.exp %223 : vector<8x128xf32>
    %cst_58 = arith.constant 1.000000e+00 : f32
    %225 = vector.broadcast %cst_58 : f32 to vector<8x128xf32>
    %226 = arith.addf %225, %224 : vector<8x128xf32>
    %227 = arith.divf %225, %226 : vector<8x128xf32>
    %228 = arith.mulf %219, %197 : vector<8x128xf32>
    %229 = arith.mulf %213, %221 : vector<8x128xf32>
    %230 = arith.addf %228, %229 : vector<8x128xf32>
    %231 = math.tanh %230 : vector<8x128xf32>
    %232 = arith.mulf %227, %231 : vector<8x128xf32>
    %233 = vector.extract_strided_slice %38 {offsets = [6, 0], sizes = [2, 512], strides = [1, 1]} : vector<16x512xf32> to vector<2x512xf32>
    %234 = vector.extract_strided_slice %41 {offsets = [0, 0], sizes = [2, 512], strides = [1, 1]} : vector<3x512xf32> to vector<2x512xf32>
    %235 = vector.extract_strided_slice %38 {offsets = [14, 0], sizes = [2, 512], strides = [1, 1]} : vector<16x512xf32> to vector<2x512xf32>
    %236 = vector.extract_strided_slice %41 {offsets = [0, 0], sizes = [2, 512], strides = [1, 1]} : vector<3x512xf32> to vector<2x512xf32>
    %237 = tpu.concatenate %233, %234, %235, %236 in 0 : vector<2x512xf32>, vector<2x512xf32>, vector<2x512xf32>, vector<2x512xf32> -> vector<8x512xf32>
    %238 = arith.truncf %232 : vector<8x128xf32> to vector<8x128xbf16>
    %cst_59 = arith.constant dense<0.000000e+00> : vector<8x512xf32>
    %239 = tpu.matmul %238, %42, %cst_59 {dimension_numbers = #tpu.dot_dimension_numbers<[1], [0], [0], [1], [0, 0, 1, 1], [], []>} : vector<8x128xbf16>, vector<128x512xbf16>, vector<8x512xf32> -> vector<8x512xf32>
    %240 = arith.addf %237, %239 : vector<8x512xf32>
    %241 = vector.extract_strided_slice %240 {offsets = [0, 0], sizes = [8, 128], strides = [1, 1]} : vector<8x512xf32> to vector<8x128xf32>
    %242 = arith.negf %241 : vector<8x128xf32>
    %243 = math.exp %242 : vector<8x128xf32>
    %cst_60 = arith.constant 1.000000e+00 : f32
    %244 = vector.broadcast %cst_60 : f32 to vector<8x128xf32>
    %245 = arith.addf %244, %243 : vector<8x128xf32>
    %246 = arith.divf %244, %245 : vector<8x128xf32>
    %247 = vector.extract_strided_slice %240 {offsets = [0, 128], sizes = [8, 128], strides = [1, 1]} : vector<8x512xf32> to vector<8x128xf32>
    %248 = arith.negf %247 : vector<8x128xf32>
    %249 = math.exp %248 : vector<8x128xf32>
    %cst_61 = arith.constant 1.000000e+00 : f32
    %250 = vector.broadcast %cst_61 : f32 to vector<8x128xf32>
    %251 = arith.addf %250, %249 : vector<8x128xf32>
    %252 = arith.divf %250, %251 : vector<8x128xf32>
    %253 = vector.extract_strided_slice %240 {offsets = [0, 256], sizes = [8, 128], strides = [1, 1]} : vector<8x512xf32> to vector<8x128xf32>
    %254 = math.tanh %253 : vector<8x128xf32>
    %255 = vector.extract_strided_slice %240 {offsets = [0, 384], sizes = [8, 128], strides = [1, 1]} : vector<8x512xf32> to vector<8x128xf32>
    %256 = arith.negf %255 : vector<8x128xf32>
    %257 = math.exp %256 : vector<8x128xf32>
    %cst_62 = arith.constant 1.000000e+00 : f32
    %258 = vector.broadcast %cst_62 : f32 to vector<8x128xf32>
    %259 = arith.addf %258, %257 : vector<8x128xf32>
    %260 = arith.divf %258, %259 : vector<8x128xf32>
    %261 = arith.mulf %252, %230 : vector<8x128xf32>
    %262 = arith.mulf %246, %254 : vector<8x128xf32>
    %263 = arith.addf %261, %262 : vector<8x128xf32>
    %264 = math.tanh %263 : vector<8x128xf32>
    %265 = arith.mulf %260, %264 : vector<8x128xf32>
    %266 = vector.extract_strided_slice %38 {offsets = [7, 0], sizes = [1, 512], strides = [1, 1]} : vector<16x512xf32> to vector<1x512xf32>
    %267 = vector.extract_strided_slice %38 {offsets = [15, 0], sizes = [1, 512], strides = [1, 1]} : vector<16x512xf32> to vector<1x512xf32>
    %268 = tpu.concatenate %266, %41, %267, %41 in 0 : vector<1x512xf32>, vector<3x512xf32>, vector<1x512xf32>, vector<3x512xf32> -> vector<8x512xf32>
    %269 = arith.truncf %265 : vector<8x128xf32> to vector<8x128xbf16>
    %cst_63 = arith.constant dense<0.000000e+00> : vector<8x512xf32>
    %270 = tpu.matmul %269, %42, %cst_63 {dimension_numbers = #tpu.dot_dimension_numbers<[1], [0], [0], [1], [0, 0, 1, 1], [], []>} : vector<8x128xbf16>, vector<128x512xbf16>, vector<8x512xf32> -> vector<8x512xf32>
    %271 = arith.addf %268, %270 : vector<8x512xf32>
    %272 = vector.extract_strided_slice %271 {offsets = [0, 0], sizes = [8, 128], strides = [1, 1]} : vector<8x512xf32> to vector<8x128xf32>
    %273 = arith.negf %272 : vector<8x128xf32>
    %274 = math.exp %273 : vector<8x128xf32>
    %cst_64 = arith.constant 1.000000e+00 : f32
    %275 = vector.broadcast %cst_64 : f32 to vector<8x128xf32>
    %276 = arith.addf %275, %274 : vector<8x128xf32>
    %277 = arith.divf %275, %276 : vector<8x128xf32>
    %278 = vector.extract_strided_slice %271 {offsets = [0, 128], sizes = [8, 128], strides = [1, 1]} : vector<8x512xf32> to vector<8x128xf32>
    %279 = arith.negf %278 : vector<8x128xf32>
    %280 = math.exp %279 : vector<8x128xf32>
    %cst_65 = arith.constant 1.000000e+00 : f32
    %281 = vector.broadcast %cst_65 : f32 to vector<8x128xf32>
    %282 = arith.addf %281, %280 : vector<8x128xf32>
    %283 = arith.divf %281, %282 : vector<8x128xf32>
    %284 = vector.extract_strided_slice %271 {offsets = [0, 256], sizes = [8, 128], strides = [1, 1]} : vector<8x512xf32> to vector<8x128xf32>
    %285 = math.tanh %284 : vector<8x128xf32>
    %286 = vector.extract_strided_slice %271 {offsets = [0, 384], sizes = [8, 128], strides = [1, 1]} : vector<8x512xf32> to vector<8x128xf32>
    %287 = arith.negf %286 : vector<8x128xf32>
    %288 = math.exp %287 : vector<8x128xf32>
    %cst_66 = arith.constant 1.000000e+00 : f32
    %289 = vector.broadcast %cst_66 : f32 to vector<8x128xf32>
    %290 = arith.addf %289, %288 : vector<8x128xf32>
    %291 = arith.divf %289, %290 : vector<8x128xf32>
    %292 = arith.mulf %283, %263 : vector<8x128xf32>
    %293 = arith.mulf %277, %285 : vector<8x128xf32>
    %294 = arith.addf %292, %293 : vector<8x128xf32>
    %295 = math.tanh %294 : vector<8x128xf32>
    %296 = arith.mulf %291, %295 : vector<8x128xf32>
    %297 = arith.truncf %296 : vector<8x128xf32> to vector<8x128xbf16>
    %c0_67 = arith.constant 0 : index
    %c0_68 = arith.constant 0 : index
    %298 = vector.load %arg14[%c0_67, %c0_68] : memref<128x128xbf16, #tpu.memory_space<vmem>>, vector<128x128xbf16>
    %cst_69 = arith.constant dense<0.000000e+00> : vector<8x128xf32>
    %299 = tpu.matmul %297, %298, %cst_69 {dimension_numbers = #tpu.dot_dimension_numbers<[1], [0], [0], [1], [0, 0, 1, 1], [], []>} : vector<8x128xbf16>, vector<128x128xbf16>, vector<8x128xf32> -> vector<8x128xf32>
    %c0_70 = arith.constant 0 : index
    %c0_71 = arith.constant 0 : index
    %300 = vector.load %arg15[%c0_70, %c0_71] : memref<1x128xf32, #tpu.memory_space<vmem>>, vector<1x128xf32>
    %301 = vector.broadcast %300 : vector<1x128xf32> to vector<8x128xf32>
    %302 = arith.addf %299, %301 : vector<8x128xf32>
    %303 = vector.extract_strided_slice %302 {offsets = [0, 0], sizes = [4, 128], strides = [1, 1]} : vector<8x128xf32> to vector<4x128xf32>
    %c0_72 = arith.constant 0 : index
    %c0_73 = arith.constant 0 : index
    %c0_74 = arith.constant 0 : index
    %304 = vector.load %arg16[%c0_72, %c0_73, %c0_74] : memref<2x4x128xf32, #tpu.memory_space<vmem>>, vector<1x4x128xf32>
    %305 = vector.shape_cast %304 : vector<1x4x128xf32> to vector<4x128xf32>
    %306 = vector.shape_cast %303 : vector<4x128xf32> to vector<1x4x128xf32>
    tpu.vector_store %arg16[%c0_72, %c0_73, %c0_74], %306 {strides = array<i32>} : memref<2x4x128xf32, #tpu.memory_space<vmem>>, vector<1x4x128xf32>,
    %307 = vector.extract_strided_slice %302 {offsets = [4, 0], sizes = [4, 128], strides = [1, 1]} : vector<8x128xf32> to vector<4x128xf32>
    %c1 = arith.constant 1 : index
    %c0_75 = arith.constant 0 : index
    %c0_76 = arith.constant 0 : index
    %308 = vector.load %arg16[%c1, %c0_75, %c0_76] : memref<2x4x128xf32, #tpu.memory_space<vmem>>, vector<1x4x128xf32>
    %309 = vector.shape_cast %308 : vector<1x4x128xf32> to vector<4x128xf32>
    %310 = vector.shape_cast %307 : vector<4x128xf32> to vector<1x4x128xf32>
    tpu.vector_store %arg16[%c1, %c0_75, %c0_76], %310 {strides = array<i32>} : memref<2x4x128xf32, #tpu.memory_space<vmem>>, vector<1x4x128xf32>,
    return
  }
  func.func @transform_0(%arg0: i32) -> (i32, i32) {
    %c0_i32 = arith.constant 0 : i32
    %c0_i32_0 = arith.constant 0 : i32
    return %arg0, %c0_i32 : i32, i32
  }
  func.func @transform_1(%arg0: i32) -> (i32, i32) {
    %c0_i32 = arith.constant 0 : i32
    %c0_i32_0 = arith.constant 0 : i32
    %c0_i32_1 = arith.constant 0 : i32
    return %c0_i32, %c0_i32_0 : i32, i32
  }
  func.func @transform_2(%arg0: i32) -> (i32, i32) {
    %c0_i32 = arith.constant 0 : i32
    %c0_i32_0 = arith.constant 0 : i32
    %c0_i32_1 = arith.constant 0 : i32
    return %c0_i32, %c0_i32_0 : i32, i32
  }
  func.func @transform_3(%arg0: i32) -> (i32, i32) {
    %c0_i32 = arith.constant 0 : i32
    %c0_i32_0 = arith.constant 0 : i32
    %c0_i32_1 = arith.constant 0 : i32
    return %c0_i32, %c0_i32_0 : i32, i32
  }
  func.func @transform_4(%arg0: i32) -> (i32, i32) {
    %c0_i32 = arith.constant 0 : i32
    %c0_i32_0 = arith.constant 0 : i32
    %c0_i32_1 = arith.constant 0 : i32
    return %c0_i32, %c0_i32_0 : i32, i32
  }
  func.func @transform_5(%arg0: i32) -> (i32, i32) {
    %c0_i32 = arith.constant 0 : i32
    %c0_i32_0 = arith.constant 0 : i32
    %c0_i32_1 = arith.constant 0 : i32
    return %c0_i32, %c0_i32_0 : i32, i32
  }
  func.func @transform_6(%arg0: i32) -> (i32, i32) {
    %c0_i32 = arith.constant 0 : i32
    %c0_i32_0 = arith.constant 0 : i32
    %c0_i32_1 = arith.constant 0 : i32
    return %c0_i32, %c0_i32_0 : i32, i32
  }
  func.func @transform_7(%arg0: i32) -> (i32, i32) {
    %c0_i32 = arith.constant 0 : i32
    %c0_i32_0 = arith.constant 0 : i32
    %c0_i32_1 = arith.constant 0 : i32
    return %c0_i32, %c0_i32_0 : i32, i32
  }
  func.func @transform_8(%arg0: i32) -> (i32, i32) {
    %c0_i32 = arith.constant 0 : i32
    %c0_i32_0 = arith.constant 0 : i32
    %c0_i32_1 = arith.constant 0 : i32
    return %c0_i32, %c0_i32_0 : i32, i32
  }
  func.func @transform_9(%arg0: i32) -> (i32, i32) {
    %c0_i32 = arith.constant 0 : i32
    %c0_i32_0 = arith.constant 0 : i32
    %c0_i32_1 = arith.constant 0 : i32
    return %c0_i32, %c0_i32_0 : i32, i32
  }
  func.func @transform_10(%arg0: i32) -> (i32, i32) {
    %c0_i32 = arith.constant 0 : i32
    %c0_i32_0 = arith.constant 0 : i32
    %c0_i32_1 = arith.constant 0 : i32
    return %c0_i32, %c0_i32_0 : i32, i32
  }
  func.func @transform_11(%arg0: i32) -> (i32, i32) {
    %c0_i32 = arith.constant 0 : i32
    %c0_i32_0 = arith.constant 0 : i32
    %c0_i32_1 = arith.constant 0 : i32
    return %c0_i32, %c0_i32_0 : i32, i32
  }
  func.func @transform_12(%arg0: i32) -> (i32, i32) {
    %c0_i32 = arith.constant 0 : i32
    %c0_i32_0 = arith.constant 0 : i32
    %c0_i32_1 = arith.constant 0 : i32
    return %c0_i32, %c0_i32_0 : i32, i32
  }
  func.func @transform_13(%arg0: i32) -> (i32, i32) {
    %c0_i32 = arith.constant 0 : i32
    %c0_i32_0 = arith.constant 0 : i32
    %c0_i32_1 = arith.constant 0 : i32
    return %c0_i32, %c0_i32_0 : i32, i32
  }
  func.func @transform_14(%arg0: i32) -> (i32, i32) {
    %c0_i32 = arith.constant 0 : i32
    %c0_i32_0 = arith.constant 0 : i32
    %c0_i32_1 = arith.constant 0 : i32
    return %c0_i32, %c0_i32_0 : i32, i32
  }
  func.func @transform_15(%arg0: i32) -> (i32, i32, i32) {
    %c0_i32 = arith.constant 0 : i32
    %c0_i32_0 = arith.constant 0 : i32
    %c0_i32_1 = arith.constant 0 : i32
    return %arg0, %c0_i32, %c0_i32_0 : i32, i32, i32
  }
}

</mosaic_0001>

<llo_original>
// kernel: reward_induced_rep_forward.1
$region0: #{reward_induced_rep_forward.1}
  #allocation0 [shape = 'u32[]', space=smem, size = 0x4, offset = 0x4, fixed_abs, tag = 'smem constant byte address 0x4 - core index']
  #allocation1 [shape = 'u32[144,128]{1,0:T(1,128)}', space=vmem, size = 0x12000, scoped, tag = 'internal scratch']
  %s0 = inlined_call_operand.vmem [shape: f32[16,256], index: 0, kind: input, shape index: {}]
  %s1 = inlined_call_operand.vmem [shape: bf16[256,256], index: 1, kind: input, shape index: {}]
  %s2 = inlined_call_operand.hbm [shape: f32[1,256], index: 2, kind: input, shape index: {}]
  %s3 = inlined_call_operand.vmem [shape: bf16[256,128], index: 3, kind: input, shape index: {}]
  %s4 = inlined_call_operand.vmem [shape: f32[1,128], index: 4, kind: input, shape index: {}]
  %s5 = inlined_call_operand.vmem [shape: bf16[128,64], index: 5, kind: input, shape index: {}]
  %s6 = inlined_call_operand.hbm [shape: f32[1,64], index: 6, kind: input, shape index: {}]
  %s7 = inlined_call_operand.vmem [shape: bf16[64,32], index: 7, kind: input, shape index: {}]
  %s8 = inlined_call_operand.hbm [shape: f32[1,32], index: 8, kind: input, shape index: {}]
  %s9 = inlined_call_operand.vmem [shape: bf16[32,512], index: 9, kind: input, shape index: {}]
  %s10 = inlined_call_operand.vmem [shape: f32[1,512], index: 10, kind: input, shape index: {}]
  %s11 = inlined_call_operand.hbm [shape: bf16[128,512], index: 11, kind: input, shape index: {}]
  %s12 = inlined_call_operand.hbm [shape: f32[1,512], index: 12, kind: input, shape index: {}]
  %s13 = inlined_call_operand.hbm [shape: bf16[128,128], index: 13, kind: input, shape index: {}]
  %s14 = inlined_call_operand.hbm [shape: f32[1,128], index: 14, kind: input, shape index: {}]
  %s15 = inlined_call_operand.vmem [shape: f32[2,4,128], index: 15, kind: output, shape index: {}]
  %s16 = sld [smem:[#allocation0]]
  $region98: #{reward_induced_rep_forward.1} parent=0
    _
  %s18 = ssub.s32 1, %s16
  %s19 = scalar_select 0, %s18, %s16
  $region1: #{reward_induced_rep_forward.1} parent=0
    #allocation2 [shape = 'u8[1024]{0}', space=vmem, size = 0x400, scoped, tag = 'input window, operand 2, single buffered']
    #allocation3 [shape = 's32[1]{0}', space=sflag, size = 0x4, scoped, tag = 'scoped memory for reward_induced_rep_forward.1']
    #allocation4 [shape = 'u8[512]{0}', space=vmem, size = 0x400, scoped, tag = 'input window, operand 6, single buffered']
    #allocation5 [shape = 's32[1]{0}', space=sflag, size = 0x4, scoped, tag = 'scoped memory for reward_induced_rep_forward.1']
    #allocation6 [shape = 'u8[512]{0}', space=vmem, size = 0x400, scoped, tag = 'input window, operand 8, single buffered']
    #allocation7 [shape = 'u8[131072]{0}', space=vmem, size = 0x20000, scoped, tag = 'input window, operand 11, single buffered']
    #allocation8 [shape = 's32[1]{0}', space=sflag, size = 0x4, scoped, tag = 'scoped memory for reward_induced_rep_forward.1']
    #allocation9 [shape = 'u8[2048]{0}', space=vmem, size = 0x800, scoped, tag = 'input window, operand 12, single buffered']
    #allocation10 [shape = 'u8[32768]{0}', space=vmem, size = 0x8000, scoped, tag = 'input window, operand 13, single buffered']
    #allocation11 [shape = 's32[1]{0}', space=sflag, size = 0x4, scoped, tag = 'scoped memory for reward_induced_rep_forward.1']
    #allocation12 [shape = 'u8[512]{0}', space=vmem, size = 0x400, scoped, tag = 'input window, operand 14, single buffered']
    %20 = vsyncpa [#allocation3], 0
    %21 = vsyncpa [#allocation5], 0
    %22 = vsyncpa [#allocation8], 0
    %23 = vsyncpa [#allocation11], 0
    // Predicated region
    $region2: #{reward_induced_rep_forward.1} parent=1 // pred_check
      _
    $region3: #{reward_induced_rep_forward.1} parent=1 // pred_check_branch
      %25 = sbr.rel (0) target = $region5
    $region4: #{reward_induced_rep_forward.1} parent=1 // pred_region
      _
    $region5: #{reward_induced_rep_forward.1} parent=1 // pred_fallthru
      _
    // Predicated region
    $region6: #{reward_induced_rep_forward.1} parent=1 // pred_check
      _
    $region7: #{reward_induced_rep_forward.1} parent=1 // pred_check_branch
      %27 = sbr.rel (0) target = $region9
    $region8: #{reward_induced_rep_forward.1} parent=1 // pred_region
      _
    $region9: #{reward_induced_rep_forward.1} parent=1 // pred_fallthru
      _
    // Predicated region
    $region10: #{reward_induced_rep_forward.1} parent=1 // pred_check
      _
    $region11: #{reward_induced_rep_forward.1} parent=1 // pred_check_branch
      %29 = sbr.rel (0) target = $region13
    $region12: #{reward_induced_rep_forward.1} parent=1 // pred_region
      %s31 = ssub.s32 32, 32
      %32 = vsyncadd [#allocation3], %s31
      %s34 = sshll.u32 [#allocation2], 4
      %s35 = int_to_ptr.vmem [resolvable:$true] %s34
      %37 = dma.hbm_to_vmem [thread:$0]  %s2, 32, %s35, [#allocation3]
    $region13: #{reward_induced_rep_forward.1} parent=1 // pred_fallthru
      _
    // Predicated region
    $region14: #{reward_induced_rep_forward.1} parent=1 // pred_check
      _
    $region15: #{reward_induced_rep_forward.1} parent=1 // pred_check_branch
      %39 = sbr.rel (0) target = $region17
    $region16: #{reward_induced_rep_forward.1} parent=1 // pred_region
      _
    $region17: #{reward_induced_rep_forward.1} parent=1 // pred_fallthru
      _
    // Predicated region
    $region18: #{reward_induced_rep_forward.1} parent=1 // pred_check
      _
    $region19: #{reward_induced_rep_forward.1} parent=1 // pred_check_branch
      %41 = sbr.rel (0) target = $region21
    $region20: #{reward_induced_rep_forward.1} parent=1 // pred_region
      _
    $region21: #{reward_induced_rep_forward.1} parent=1 // pred_fallthru
      _
    // Predicated region
    $region22: #{reward_induced_rep_forward.1} parent=1 // pred_check
      _
    $region23: #{reward_induced_rep_forward.1} parent=1 // pred_check_branch
      %43 = sbr.rel (0) target = $region25
    $region24: #{reward_induced_rep_forward.1} parent=1 // pred_region
      _
    $region25: #{reward_induced_rep_forward.1} parent=1 // pred_fallthru
      _
    // Predicated region
    $region26: #{reward_induced_rep_forward.1} parent=1 // pred_check
      _
    $region27: #{reward_induced_rep_forward.1} parent=1 // pred_check_branch
      %45 = sbr.rel (0) target = $region29
    $region28: #{reward_induced_rep_forward.1} parent=1 // pred_region
      %s47 = ssub.s32 16, 16
      %48 = vsyncadd [#allocation5], %s47
      %s50 = sshll.u32 [#allocation4], 4
      %s51 = int_to_ptr.vmem [resolvable:$true] %s50
      %53 = dma.hbm_to_vmem [thread:$0]  %s6, 16, %s51, [#allocation5]
    $region29: #{reward_induced_rep_forward.1} parent=1 // pred_fallthru
      _
    // Predicated region
    $region30: #{reward_induced_rep_forward.1} parent=1 // pred_check
      _
    $region31: #{reward_induced_rep_forward.1} parent=1 // pred_check_branch
      %55 = sbr.rel (0) target = $region33
    $region32: #{reward_induced_rep_forward.1} parent=1 // pred_region
      _
    $region33: #{reward_induced_rep_forward.1} parent=1 // pred_fallthru
      _
    // Predicated region
    $region34: #{reward_induced_rep_forward.1} parent=1 // pred_check
      _
    $region35: #{reward_induced_rep_forward.1} parent=1 // pred_check_branch
      %57 = sbr.rel (0) target = $region37
    $region36: #{reward_induced_rep_forward.1} parent=1 // pred_region
      %s59 = ssub.s32 16, 16
      %60 = vsyncadd [#allocation5], %s59
      %s62 = sshll.u32 [#allocation6], 4
      %s63 = int_to_ptr.vmem [resolvable:$true] %s62
      %65 = dma.hbm_to_vmem [thread:$0]  %s8, 16, %s63, [#allocation5]
    $region37: #{reward_induced_rep_forward.1} parent=1 // pred_fallthru
      _
    // Predicated region
    $region38: #{reward_induced_rep_forward.1} parent=1 // pred_check
      _
    $region39: #{reward_induced_rep_forward.1} parent=1 // pred_check_branch
      %67 = sbr.rel (0) target = $region41
    $region40: #{reward_induced_rep_forward.1} parent=1 // pred_region
      _
    $region41: #{reward_induced_rep_forward.1} parent=1 // pred_fallthru
      _
    // Predicated region
    $region42: #{reward_induced_rep_forward.1} parent=1 // pred_check
      _
    $region43: #{reward_induced_rep_forward.1} parent=1 // pred_check_branch
      %69 = sbr.rel (0) target = $region45
    $region44: #{reward_induced_rep_forward.1} parent=1 // pred_region
      _
    $region45: #{reward_induced_rep_forward.1} parent=1 // pred_fallthru
      _
    // Predicated region
    $region46: #{reward_induced_rep_forward.1} parent=1 // pred_check
      _
    $region47: #{reward_induced_rep_forward.1} parent=1 // pred_check_branch
      %71 = sbr.rel (0) target = $region49
    $region48: #{reward_induced_rep_forward.1} parent=1 // pred_region
      %s73 = ssub.s32 4096, 4096
      %74 = vsyncadd [#allocation8], %s73
      %s75 = sshll.u32 [#allocation7], 4
      %s76 = int_to_ptr.vmem [resolvable:$true] %s75
      %81 = dma.hbm_to_vmem [thread:$0]  %s11, 4096, %s76, [#allocation8], 256, 256, 16
    $region49: #{reward_induced_rep_forward.1} parent=1 // pred_fallthru
      _
    // Predicated region
    $region50: #{reward_induced_rep_forward.1} parent=1 // pred_check
      _
    $region51: #{reward_induced_rep_forward.1} parent=1 // pred_check_branch
      %83 = sbr.rel (0) target = $region53
    $region52: #{reward_induced_rep_forward.1} parent=1 // pred_region
      %s85 = ssub.s32 64, 64
      %86 = vsyncadd [#allocation8], %s85
      %s88 = sshll.u32 [#allocation9], 4
      %s89 = int_to_ptr.vmem [resolvable:$true] %s88
      %91 = dma.hbm_to_vmem [thread:$0]  %s12, 64, %s89, [#allocation8]
    $region53: #{reward_induced_rep_forward.1} parent=1 // pred_fallthru
      _
    // Predicated region
    $region54: #{reward_induced_rep_forward.1} parent=1 // pred_check
      _
    $region55: #{reward_induced_rep_forward.1} parent=1 // pred_check_branch
      %93 = sbr.rel (0) target = $region57
    $region56: #{reward_induced_rep_forward.1} parent=1 // pred_region
      %s95 = ssub.s32 1024, 1024
      %96 = vsyncadd [#allocation11], %s95
      %s97 = sshll.u32 [#allocation10], 4
      %s98 = int_to_ptr.vmem [resolvable:$true] %s97
      %103 = dma.hbm_to_vmem [thread:$0]  %s13, 1024, %s98, [#allocation11], 64, 64, 4
    $region57: #{reward_induced_rep_forward.1} parent=1 // pred_fallthru
      _
    // Predicated region
    $region58: #{reward_induced_rep_forward.1} parent=1 // pred_check
      _
    $region59: #{reward_induced_rep_forward.1} parent=1 // pred_check_branch
      %105 = sbr.rel (0) target = $region61
    $region60: #{reward_induced_rep_forward.1} parent=1 // pred_region
      %s107 = ssub.s32 16, 16
      %108 = vsyncadd [#allocation11], %s107
      %s110 = sshll.u32 [#allocation12], 4
      %s111 = int_to_ptr.vmem [resolvable:$true] %s110
      %113 = dma.hbm_to_vmem [thread:$0]  %s14, 16, %s111, [#allocation11]
    $region61: #{reward_induced_rep_forward.1} parent=1 // pred_fallthru
      _
    // Predicated region
    $region62: #{reward_induced_rep_forward.1} parent=1 // pred_check
      _
    $region63: #{reward_induced_rep_forward.1} parent=1 // pred_check_branch
      %115 = sbr.rel (0) target = $region65
    $region64: #{reward_induced_rep_forward.1} parent=1 // pred_region
      %116 = dma.done [#allocation3], 32
    $region65: #{reward_induced_rep_forward.1} parent=1 // pred_fallthru
      _
    // Predicated region
    $region66: #{reward_induced_rep_forward.1} parent=1 // pred_check
      _
    $region67: #{reward_induced_rep_forward.1} parent=1 // pred_check_branch
      %118 = sbr.rel (0) target = $region69
    $region68: #{reward_induced_rep_forward.1} parent=1 // pred_region
      %119 = dma.done [#allocation5], 16
    $region69: #{reward_induced_rep_forward.1} parent=1 // pred_fallthru
      _
    // Predicated region
    $region70: #{reward_induced_rep_forward.1} parent=1 // pred_check
      _
    $region71: #{reward_induced_rep_forward.1} parent=1 // pred_check_branch
      %121 = sbr.rel (0) target = $region73
    $region72: #{reward_induced_rep_forward.1} parent=1 // pred_region
      %122 = dma.done [#allocation5], 16
    $region73: #{reward_induced_rep_forward.1} parent=1 // pred_fallthru
      _
    // Predicated region
    $region74: #{reward_induced_rep_forward.1} parent=1 // pred_check
      _
    $region75: #{reward_induced_rep_forward.1} parent=1 // pred_check_branch
      %124 = sbr.rel (0) target = $region77
    $region76: #{reward_induced_rep_forward.1} parent=1 // pred_region
      %125 = dma.done [#allocation8], 4096
    $region77: #{reward_induced_rep_forward.1} parent=1 // pred_fallthru
      _
    // Predicated region
    $region78: #{reward_induced_rep_forward.1} parent=1 // pred_check
      _
    $region79: #{reward_induced_rep_forward.1} parent=1 // pred_check_branch
      %127 = sbr.rel (0) target = $region81
    $region80: #{reward_induced_rep_forward.1} parent=1 // pred_region
      %128 = dma.done [#allocation8], 64
    $region81: #{reward_induced_rep_forward.1} parent=1 // pred_fallthru
      _
    // Predicated region
    $region82: #{reward_induced_rep_forward.1} parent=1 // pred_check
      _
    $region83: #{reward_induced_rep_forward.1} parent=1 // pred_check_branch
      %130 = sbr.rel (0) target = $region85
    $region84: #{reward_induced_rep_forward.1} parent=1 // pred_region
      %131 = dma.done [#allocation11], 1024
    $region85: #{reward_induced_rep_forward.1} parent=1 // pred_fallthru
      _
    // Predicated region
    $region86: #{reward_induced_rep_forward.1} parent=1 // pred_check
      _
    $region87: #{reward_induced_rep_forward.1} parent=1 // pred_check_branch
      %133 = sbr.rel (0) target = $region89
    $region88: #{reward_induced_rep_forward.1} parent=1 // pred_region
      %134 = dma.done [#allocation11], 16
    $region89: #{reward_induced_rep_forward.1} parent=1 // pred_fallthru
      _
    %v136 = vld [vmem:[%s0] sm:$0xff]
    %v137 = vld [vmem:[%s0 + $0x8] sm:$0xff]
    %v138 = vld [vmem:[%s0 + $0x10] sm:$0xff]
    %v139 = vld [vmem:[%s0 + $0x18] sm:$0xff]
    %v140 = vpack.c.bf16 %v138, %v136
    %v141 = vpack.c.bf16 %v139, %v137
    %v142 = vld [vmem:[%s1] sm:$0xff]
    %v143 = vld [vmem:[%s1 + $0x8] sm:$0xff]
    %v144 = vld [vmem:[%s1 + $0x10] sm:$0xff]
    %v145 = vld [vmem:[%s1 + $0x18] sm:$0xff]
    %v146 = vld [vmem:[%s1 + $0x20] sm:$0xff]
    %v147 = vld [vmem:[%s1 + $0x28] sm:$0xff]
    %v148 = vld [vmem:[%s1 + $0x30] sm:$0xff]
    %v149 = vld [vmem:[%s1 + $0x38] sm:$0xff]
    %v150 = vld [vmem:[%s1 + $0x40] sm:$0xff]
    %v151 = vld [vmem:[%s1 + $0x48] sm:$0xff]
    %v152 = vld [vmem:[%s1 + $0x50] sm:$0xff]
    %v153 = vld [vmem:[%s1 + $0x58] sm:$0xff]
    %v154 = vld [vmem:[%s1 + $0x60] sm:$0xff]
    %v155 = vld [vmem:[%s1 + $0x68] sm:$0xff]
    %v156 = vld [vmem:[%s1 + $0x70] sm:$0xff]
    %v157 = vld [vmem:[%s1 + $0x78] sm:$0xff]
    %v158 = vld [vmem:[%s1 + $0x80] sm:$0xff]
    %v159 = vld [vmem:[%s1 + $0x88] sm:$0xff]
    %v160 = vld [vmem:[%s1 + $0x90] sm:$0xff]
    %v161 = vld [vmem:[%s1 + $0x98] sm:$0xff]
    %v162 = vld [vmem:[%s1 + $0xa0] sm:$0xff]
    %v163 = vld [vmem:[%s1 + $0xa8] sm:$0xff]
    %v164 = vld [vmem:[%s1 + $0xb0] sm:$0xff]
    %v165 = vld [vmem:[%s1 + $0xb8] sm:$0xff]
    %v166 = vld [vmem:[%s1 + $0xc0] sm:$0xff]
    %v167 = vld [vmem:[%s1 + $0xc8] sm:$0xff]
    %v168 = vld [vmem:[%s1 + $0xd0] sm:$0xff]
    %v169 = vld [vmem:[%s1 + $0xd8] sm:$0xff]
    %v170 = vld [vmem:[%s1 + $0xe0] sm:$0xff]
    %v171 = vld [vmem:[%s1 + $0xe8] sm:$0xff]
    %v172 = vld [vmem:[%s1 + $0xf0] sm:$0xff]
    %v173 = vld [vmem:[%s1 + $0xf8] sm:$0xff]
    %v174 = vld [vmem:[#allocation2] sm:$0x3]
    %v176 = vlaneseq
    %v177 = vshrl.u32 %v176, 7
    %v178 = vsub.s32 0, %v177
    %v179 = vrot.slane %v174, %v178
    %v180 = vlaneseq
    %v181 = vshrl.u32 %v180, 7
    %v182 = vsub.s32 1, %v181
    %v183 = vrot.slane %v174, %v182
    %v218 = vunpack.c.l.b16 %v142
    %v219 = vunpack.c.h.b16 %v142
    %v220 = vunpack.c.l.b16 %v143
    %v221 = vunpack.c.h.b16 %v143
    %v222 = vunpack.c.l.b16 %v144
    %v223 = vunpack.c.h.b16 %v144
    %v224 = vunpack.c.l.b16 %v145
    %v225 = vunpack.c.h.b16 %v145
    %v226 = vunpack.c.l.b16 %v146
    %v227 = vunpack.c.h.b16 %v146
    %v228 = vunpack.c.l.b16 %v147
    %v229 = vunpack.c.h.b16 %v147
    %v230 = vunpack.c.l.b16 %v148
    %v231 = vunpack.c.h.b16 %v148
    %v232 = vunpack.c.l.b16 %v149
    %v233 = vunpack.c.h.b16 %v149
    %v234 = vunpack.c.l.b16 %v150
    %v235 = vunpack.c.h.b16 %v150
    %v236 = vunpack.c.l.b16 %v151
    %v237 = vunpack.c.h.b16 %v151
    %v238 = vunpack.c.l.b16 %v152
    %v239 = vunpack.c.h.b16 %v152
    %v240 = vunpack.c.l.b16 %v153
    %v241 = vunpack.c.h.b16 %v153
    %v242 = vunpack.c.l.b16 %v154
    %v243 = vunpack.c.h.b16 %v154
    %v244 = vunpack.c.l.b16 %v155
    %v245 = vunpack.c.h.b16 %v155
    %v246 = vunpack.c.l.b16 %v156
    %v247 = vunpack.c.h.b16 %v156
    %v248 = vunpack.c.l.b16 %v157
    %v249 = vunpack.c.h.b16 %v157
    %v250 = vunpack.c.l.b16 %v158
    %v251 = vunpack.c.h.b16 %v158
    %v252 = vunpack.c.l.b16 %v159
    %v253 = vunpack.c.h.b16 %v159
    %v254 = vunpack.c.l.b16 %v160
    %v255 = vunpack.c.h.b16 %v160
    %v256 = vunpack.c.l.b16 %v161
    %v257 = vunpack.c.h.b16 %v161
    %v258 = vunpack.c.l.b16 %v162
    %v259 = vunpack.c.h.b16 %v162
    %v260 = vunpack.c.l.b16 %v163
    %v261 = vunpack.c.h.b16 %v163
    %v262 = vunpack.c.l.b16 %v164
    %v263 = vunpack.c.h.b16 %v164
    %v264 = vunpack.c.l.b16 %v165
    %v265 = vunpack.c.h.b16 %v165
    %v266 = vunpack.c.l.b16 %v166
    %v267 = vunpack.c.h.b16 %v166
    %v268 = vunpack.c.l.b16 %v167
    %v269 = vunpack.c.h.b16 %v167
    %v270 = vunpack.c.l.b16 %v168
    %v271 = vunpack.c.h.b16 %v168
    %v272 = vunpack.c.l.b16 %v169
    %v273 = vunpack.c.h.b16 %v169
    %v274 = vunpack.c.l.b16 %v170
    %v275 = vunpack.c.h.b16 %v170
    %v276 = vunpack.c.l.b16 %v171
    %v277 = vunpack.c.h.b16 %v171
    %v278 = vunpack.c.l.b16 %v172
    %v279 = vunpack.c.h.b16 %v172
    %v280 = vunpack.c.l.b16 %v173
    %v281 = vunpack.c.h.b16 %v173
    %v282 = vpack.c.b16 %v220, %v218
    %v283 = vpack.c.b16 %v221, %v219
    %v284 = vpack.c.b16 %v224, %v222
    %v285 = vpack.c.b16 %v225, %v223
    %v286 = vpack.c.b16 %v228, %v226
    %v287 = vpack.c.b16 %v229, %v227
    %v288 = vpack.c.b16 %v232, %v230
    %v289 = vpack.c.b16 %v233, %v231
    %v290 = vpack.c.b16 %v236, %v234
    %v291 = vpack.c.b16 %v237, %v235
    %v292 = vpack.c.b16 %v240, %v238
    %v293 = vpack.c.b16 %v241, %v239
    %v294 = vpack.c.b16 %v244, %v242
    %v295 = vpack.c.b16 %v245, %v243
    %v296 = vpack.c.b16 %v248, %v246
    %v297 = vpack.c.b16 %v249, %v247
    %v298 = vpack.c.b16 %v252, %v250
    %v299 = vpack.c.b16 %v253, %v251
    %v300 = vpack.c.b16 %v256, %v254
    %v301 = vpack.c.b16 %v257, %v255
    %v302 = vpack.c.b16 %v260, %v258
    %v303 = vpack.c.b16 %v261, %v259
    %v304 = vpack.c.b16 %v264, %v262
    %v305 = vpack.c.b16 %v265, %v263
    %v306 = vpack.c.b16 %v268, %v266
    %v307 = vpack.c.b16 %v269, %v267
    %v308 = vpack.c.b16 %v272, %v270
    %v309 = vpack.c.b16 %v273, %v271
    %v310 = vpack.c.b16 %v276, %v274
    %v311 = vpack.c.b16 %v277, %v275
    %v312 = vpack.c.b16 %v280, %v278
    %v313 = vpack.c.b16 %v281, %v279
    %346 = vmatprep.subr.bf16.mxu0 %v283
    %347 = vmatpush1.bf16.msra.mxu0 %v282
    %348 = vmatprep.subr.bf16.mxu0 %v285
    %349 = vmatpush1.bf16.msra.mxu0 %v284
    %350 = vmatprep.subr.bf16.mxu0 %v287
    %351 = vmatpush1.bf16.msra.mxu0 %v286
    %352 = vmatprep.subr.bf16.mxu0 %v289
    %353 = vmatpush1.bf16.msra.mxu0 %v288
    %354 = vmatprep.subr.bf16.mxu0 %v291
    %355 = vmatpush1.bf16.msra.mxu0 %v290
    %356 = vmatprep.subr.bf16.mxu0 %v293
    %357 = vmatpush1.bf16.msra.mxu0 %v292
    %358 = vmatprep.subr.bf16.mxu0 %v295
    %359 = vmatpush1.bf16.msra.mxu0 %v294
    %360 = vmatprep.subr.bf16.mxu0 %v297
    %361 = vmatpush1.bf16.msra.mxu0 %v296
    %362 = vmatprep.subr.bf16.mxu0 %v299
    %363 = vmatpush1.bf16.msra.mxu0 %v298
    %364 = vmatprep.subr.bf16.mxu0 %v301
    %365 = vmatpush1.bf16.msra.mxu0 %v300
    %366 = vmatprep.subr.bf16.mxu0 %v303
    %367 = vmatpush1.bf16.msra.mxu0 %v302
    %368 = vmatprep.subr.bf16.mxu0 %v305
    %369 = vmatpush1.bf16.msra.mxu0 %v304
    %370 = vmatprep.subr.bf16.mxu0 %v307
    %371 = vmatpush1.bf16.msra.mxu0 %v306
    %372 = vmatprep.subr.bf16.mxu0 %v309
    %373 = vmatpush1.bf16.msra.mxu0 %v308
    %374 = vmatprep.subr.bf16.mxu0 %v311
    %375 = vmatpush1.bf16.msra.mxu0 %v310
    %376 = vmatprep.subr.bf16.mxu0 %v313
    %377 = vmatpush1.bf16.msra.mxu0 %v312
    %378 = vmatprep.mubr.bf16.mxu0 %v141
    %379 = vmatmul.mubr.bf16.gmra.mrb[0].mxu0 %v140
    %v380 = vpop.f32.mrb[0].mxu0
    %v381 = vadd.f32 %v179, %v380
    %v382 = vpop.f32.mrb[0].mxu0
    %v383 = vadd.f32 %v183, %v382
    %v384 = vpop.f32.mrb[0].mxu0
    %v385 = vadd.f32 %v179, %v384
    %v386 = vpop.f32.mrb[0].mxu0
    %v387 = vadd.f32 %v183, %v386
    %388 = vdwg.mxu0
    %v389 = vmax.f32 %v381, 0.0
    %v390 = vmax.f32 %v383, 0.0
    %v391 = vmax.f32 %v385, 0.0
    %v392 = vmax.f32 %v387, 0.0
    %v393 = vpack.c.bf16 %v391, %v389
    %v394 = vpack.c.bf16 %v392, %v390
    %v395 = vld [vmem:[%s3] sm:$0xf]
    %v396 = vld [vmem:[%s3 + $0x4] sm:$0xf]
    %v397 = vld [vmem:[%s3 + $0x8] sm:$0xf]
    %v398 = vld [vmem:[%s3 + $0xc] sm:$0xf]
    %v399 = vld [vmem:[%s3 + $0x10] sm:$0xf]
    %v400 = vld [vmem:[%s3 + $0x14] sm:$0xf]
    %v401 = vld [vmem:[%s3 + $0x18] sm:$0xf]
    %v402 = vld [vmem:[%s3 + $0x1c] sm:$0xf]
    %v403 = vld [vmem:[%s3 + $0x20] sm:$0xf]
    %v404 = vld [vmem:[%s3 + $0x24] sm:$0xf]
    %v405 = vld [vmem:[%s3 + $0x28] sm:$0xf]
    %v406 = vld [vmem:[%s3 + $0x2c] sm:$0xf]
    %v407 = vld [vmem:[%s3 + $0x30] sm:$0xf]
    %v408 = vld [vmem:[%s3 + $0x34] sm:$0xf]
    %v409 = vld [vmem:[%s3 + $0x38] sm:$0xf]
    %v410 = vld [vmem:[%s3 + $0x3c] sm:$0xf]
    %v411 = vld [vmem:[%s3 + $0x40] sm:$0xf]
    %v412 = vld [vmem:[%s3 + $0x44] sm:$0xf]
    %v413 = vld [vmem:[%s3 + $0x48] sm:$0xf]
    %v414 = vld [vmem:[%s3 + $0x4c] sm:$0xf]
    %v415 = vld [vmem:[%s3 + $0x50] sm:$0xf]
    %v416 = vld [vmem:[%s3 + $0x54] sm:$0xf]
    %v417 = vld [vmem:[%s3 + $0x58] sm:$0xf]
    %v418 = vld [vmem:[%s3 + $0x5c] sm:$0xf]
    %v419 = vld [vmem:[%s3 + $0x60] sm:$0xf]
    %v420 = vld [vmem:[%s3 + $0x64] sm:$0xf]
    %v421 = vld [vmem:[%s3 + $0x68] sm:$0xf]
    %v422 = vld [vmem:[%s3 + $0x6c] sm:$0xf]
    %v423 = vld [vmem:[%s3 + $0x70] sm:$0xf]
    %v424 = vld [vmem:[%s3 + $0x74] sm:$0xf]
    %v425 = vld [vmem:[%s3 + $0x78] sm:$0xf]
    %v426 = vld [vmem:[%s3 + $0x7c] sm:$0xf]
    %v427 = vld [vmem:[%s4] sm:$0x1]
    %v429 = vlaneseq
    %v430 = vshrl.u32 %v429, 7
    %v431 = vsub.s32 0, %v430
    %v432 = vrot.slane %v427, %v431
    %v466 = vunpack.c.l.b16 %v395
    %v467 = vunpack.c.l.b16 %v396
    %v468 = vunpack.c.l.b16 %v397
    %v469 = vunpack.c.l.b16 %v398
    %v470 = vunpack.c.l.b16 %v399
    %v471 = vunpack.c.l.b16 %v400
    %v472 = vunpack.c.l.b16 %v401
    %v473 = vunpack.c.l.b16 %v402
    %v474 = vunpack.c.l.b16 %v403
    %v475 = vunpack.c.l.b16 %v404
    %v476 = vunpack.c.l.b16 %v405
    %v477 = vunpack.c.l.b16 %v406
    %v478 = vunpack.c.l.b16 %v407
    %v479 = vunpack.c.l.b16 %v408
    %v480 = vunpack.c.l.b16 %v409
    %v481 = vunpack.c.l.b16 %v410
    %v482 = vunpack.c.l.b16 %v411
    %v483 = vunpack.c.l.b16 %v412
    %v484 = vunpack.c.l.b16 %v413
    %v485 = vunpack.c.l.b16 %v414
    %v486 = vunpack.c.l.b16 %v415
    %v487 = vunpack.c.l.b16 %v416
    %v488 = vunpack.c.l.b16 %v417
    %v489 = vunpack.c.l.b16 %v418
    %v490 = vunpack.c.l.b16 %v419
    %v491 = vunpack.c.l.b16 %v420
    %v492 = vunpack.c.l.b16 %v421
    %v493 = vunpack.c.l.b16 %v422
    %v494 = vunpack.c.l.b16 %v423
    %v495 = vunpack.c.l.b16 %v424
    %v496 = vunpack.c.l.b16 %v425
    %v497 = vunpack.c.l.b16 %v426
    %v498 = vpack.c.b16 %v467, %v466
    %v499 = vpack.c.b16 %v469, %v468
    %v500 = vpack.c.b16 %v471, %v470
    %v501 = vpack.c.b16 %v473, %v472
    %v502 = vpack.c.b16 %v475, %v474
    %v503 = vpack.c.b16 %v477, %v476
    %v504 = vpack.c.b16 %v479, %v478
    %v505 = vpack.c.b16 %v481, %v480
    %v506 = vpack.c.b16 %v483, %v482
    %v507 = vpack.c.b16 %v485, %v484
    %v508 = vpack.c.b16 %v487, %v486
    %v509 = vpack.c.b16 %v489, %v488
    %v510 = vpack.c.b16 %v491, %v490
    %v511 = vpack.c.b16 %v493, %v492
    %v512 = vpack.c.b16 %v495, %v494
    %v513 = vpack.c.b16 %v497, %v496
    %530 = vmatprep.subr.bf16.mxu0 0
    %531 = vmatpush1.bf16.msra.mxu0 %v498
    %532 = vmatprep.subr.bf16.mxu0 0
    %533 = vmatpush1.bf16.msra.mxu0 %v499
    %534 = vmatprep.subr.bf16.mxu0 0
    %535 = vmatpush1.bf16.msra.mxu0 %v500
    %536 = vmatprep.subr.bf16.mxu0 0
    %537 = vmatpush1.bf16.msra.mxu0 %v501
    %538 = vmatprep.subr.bf16.mxu0 0
    %539 = vmatpush1.bf16.msra.mxu0 %v502
    %540 = vmatprep.subr.bf16.mxu0 0
    %541 = vmatpush1.bf16.msra.mxu0 %v503
    %542 = vmatprep.subr.bf16.mxu0 0
    %543 = vmatpush1.bf16.msra.mxu0 %v504
    %544 = vmatprep.subr.bf16.mxu0 0
    %545 = vmatpush1.bf16.msra.mxu0 %v505
    %546 = vmatprep.subr.bf16.mxu0 0
    %547 = vmatpush1.bf16.msra.mxu0 %v506
    %548 = vmatprep.subr.bf16.mxu0 0
    %549 = vmatpush1.bf16.msra.mxu0 %v507
    %550 = vmatprep.subr.bf16.mxu0 0
    %551 = vmatpush1.bf16.msra.mxu0 %v508
    %552 = vmatprep.subr.bf16.mxu0 0
    %553 = vmatpush1.bf16.msra.mxu0 %v509
    %554 = vmatprep.subr.bf16.mxu0 0
    %555 = vmatpush1.bf16.msra.mxu0 %v510
    %556 = vmatprep.subr.bf16.mxu0 0
    %557 = vmatpush1.bf16.msra.mxu0 %v511
    %558 = vmatprep.subr.bf16.mxu0 0
    %559 = vmatpush1.bf16.msra.mxu0 %v512
    %560 = vmatprep.subr.bf16.mxu0 0
    %561 = vmatpush1.bf16.msra.mxu0 %v513
    %562 = vmatprep.mubr.bf16.mxu0 %v394
    %563 = vmatmul.mubr.bf16.gmra.mrb[0].mxu0 %v393
    %v564 = vpop.f32.mrb[0].mxu0
    %v565 = vadd.f32 %v432, %v564
    %v566 = vpop.f32.mrb[0].mxu0
    %v567 = vpop.f32.mrb[0].mxu0
    %v568 = vadd.f32 %v432, %v567
    %v569 = vpop.f32.mrb[0].mxu0
    %570 = vdwg.mxu0
    %v571 = vmax.f32 %v565, 0.0
    %v572 = vmax.f32 %v568, 0.0
    %v573 = vpack.c.bf16 %v572, %v571
    %v574 = vld [vmem:[%s5] sm:$0xf]
    %v575 = vld [vmem:[%s5 + $0x4] sm:$0xf]
    %v576 = vld [vmem:[%s5 + $0x8] sm:$0xf]
    %v577 = vld [vmem:[%s5 + $0xc] sm:$0xf]
    %v578 = vld [vmem:[%s5 + $0x10] sm:$0xf]
    %v579 = vld [vmem:[%s5 + $0x14] sm:$0xf]
    %v580 = vld [vmem:[%s5 + $0x18] sm:$0xf]
    %v581 = vld [vmem:[%s5 + $0x1c] sm:$0xf]
    %v582 = vld [vmem:[%s5 + $0x20] sm:$0xf]
    %v583 = vld [vmem:[%s5 + $0x24] sm:$0xf]
    %v584 = vld [vmem:[%s5 + $0x28] sm:$0xf]
    %v585 = vld [vmem:[%s5 + $0x2c] sm:$0xf]
    %v586 = vld [vmem:[%s5 + $0x30] sm:$0xf]
    %v587 = vld [vmem:[%s5 + $0x34] sm:$0xf]
    %v588 = vld [vmem:[%s5 + $0x38] sm:$0xf]
    %v589 = vld [vmem:[%s5 + $0x3c] sm:$0xf]
    %v590 = vld [vmem:[#allocation4] sm:$0x1]
    %v592 = vlaneseq
    %v593 = vshrl.u32 %v592, 7
    %v594 = vsub.s32 0, %v593
    %v595 = vrot.slane %v590, %v594
    %v613 = vunpack.c.l.b16 %v574
    %v614 = vunpack.c.l.b16 %v575
    %v615 = vunpack.c.l.b16 %v576
    %v616 = vunpack.c.l.b16 %v577
    %v617 = vunpack.c.l.b16 %v578
    %v618 = vunpack.c.l.b16 %v579
    %v619 = vunpack.c.l.b16 %v580
    %v620 = vunpack.c.l.b16 %v581
    %v621 = vunpack.c.l.b16 %v582
    %v622 = vunpack.c.l.b16 %v583
    %v623 = vunpack.c.l.b16 %v584
    %v624 = vunpack.c.l.b16 %v585
    %v625 = vunpack.c.l.b16 %v586
    %v626 = vunpack.c.l.b16 %v587
    %v627 = vunpack.c.l.b16 %v588
    %v628 = vunpack.c.l.b16 %v589
    %v629 = vpack.c.b16 %v614, %v613
    %v630 = vpack.c.b16 %v616, %v615
    %v631 = vpack.c.b16 %v618, %v617
    %v632 = vpack.c.b16 %v620, %v619
    %v633 = vpack.c.b16 %v622, %v621
    %v634 = vpack.c.b16 %v624, %v623
    %v635 = vpack.c.b16 %v626, %v625
    %v636 = vpack.c.b16 %v628, %v627
    %645 = vmatprep.subr.bf16.mxu0 0
    %646 = vmatpush1.bf16.msra.mxu0 %v629
    %647 = vmatprep.subr.bf16.mxu0 0
    %648 = vmatpush1.bf16.msra.mxu0 %v630
    %649 = vmatprep.subr.bf16.mxu0 0
    %650 = vmatpush1.bf16.msra.mxu0 %v631
    %651 = vmatprep.subr.bf16.mxu0 0
    %652 = vmatpush1.bf16.msra.mxu0 %v632
    %653 = vmatprep.subr.bf16.mxu0 0
    %654 = vmatpush1.bf16.msra.mxu0 %v633
    %655 = vmatprep.subr.bf16.mxu0 0
    %656 = vmatpush1.bf16.msra.mxu0 %v634
    %657 = vmatprep.subr.bf16.mxu0 0
    %658 = vmatpush1.bf16.msra.mxu0 %v635
    %659 = vmatprep.subr.bf16.mxu0 0
    %660 = vmatpush1.bf16.msra.mxu0 %v636
    %661 = vmatprep.subr.bf16.mxu0 0
    %662 = vmatpush1.bf16.msra.mxu0 0
    %663 = vmatprep.subr.bf16.mxu0 0
    %664 = vmatpush1.bf16.msra.mxu0 0
    %665 = vmatprep.subr.bf16.mxu0 0
    %666 = vmatpush1.bf16.msra.mxu0 0
    %667 = vmatprep.subr.bf16.mxu0 0
    %668 = vmatpush1.bf16.msra.mxu0 0
    %669 = vmatprep.subr.bf16.mxu0 0
    %670 = vmatpush1.bf16.msra.mxu0 0
    %671 = vmatprep.subr.bf16.mxu0 0
    %672 = vmatpush1.bf16.msra.mxu0 0
    %673 = vmatprep.subr.bf16.mxu0 0
    %674 = vmatpush1.bf16.msra.mxu0 0
    %675 = vmatprep.subr.bf16.mxu0 0
    %676 = vmatpush1.bf16.msra.mxu0 0
    %677 = vmatprep.mubr.bf16.mxu0 0
    %678 = vmatmul.mubr.bf16.gmra.mrb[0].mxu0 %v573
    %v679 = vpop.f32.mrb[0].mxu0
    %v680 = vadd.f32 %v595, %v679
    %v681 = vpop.f32.mrb[0].mxu0
    %v682 = vpop.f32.mrb[0].mxu0
    %v683 = vadd.f32 %v595, %v682
    %v684 = vpop.f32.mrb[0].mxu0
    %685 = vdwg.mxu0
    %v686 = vmax.f32 %v680, 0.0
    %v687 = vmax.f32 %v683, 0.0
    %v688 = vpack.c.bf16 %v687, %v686
    %v689 = vld [vmem:[%s7] sm:$0xf]
    %v690 = vld [vmem:[%s7 + $0x4] sm:$0xf]
    %v691 = vld [vmem:[%s7 + $0x8] sm:$0xf]
    %v692 = vld [vmem:[%s7 + $0xc] sm:$0xf]
    %v693 = vld [vmem:[%s7 + $0x10] sm:$0xf]
    %v694 = vld [vmem:[%s7 + $0x14] sm:$0xf]
    %v695 = vld [vmem:[%s7 + $0x18] sm:$0xf]
    %v696 = vld [vmem:[%s7 + $0x1c] sm:$0xf]
    %v697 = vld [vmem:[#allocation6] sm:$0x1]
    %v699 = vlaneseq
    %v700 = vshrl.u32 %v699, 7
    %v701 = vsub.s32 0, %v700
    %v702 = vrot.slane %v697, %v701
    %v712 = vunpack.c.l.b16 %v689
    %v713 = vunpack.c.l.b16 %v690
    %v714 = vunpack.c.l.b16 %v691
    %v715 = vunpack.c.l.b16 %v692
    %v716 = vunpack.c.l.b16 %v693
    %v717 = vunpack.c.l.b16 %v694
    %v718 = vunpack.c.l.b16 %v695
    %v719 = vunpack.c.l.b16 %v696
    %v720 = vpack.c.b16 %v713, %v712
    %v721 = vpack.c.b16 %v715, %v714
    %v722 = vpack.c.b16 %v717, %v716
    %v723 = vpack.c.b16 %v719, %v718
    %vm728 = vcmask 523264
    %v730 = vsel %vm728, %v688, 0
    %732 = vmatprep.subr.bf16.mxu0 0
    %733 = vmatpush1.bf16.msra.mxu0 %v720
    %734 = vmatprep.subr.bf16.mxu0 0
    %735 = vmatpush1.bf16.msra.mxu0 %v721
    %736 = vmatprep.subr.bf16.mxu0 0
    %737 = vmatpush1.bf16.msra.mxu0 %v722
    %738 = vmatprep.subr.bf16.mxu0 0
    %739 = vmatpush1.bf16.msra.mxu0 %v723
    %740 = vmatprep.subr.bf16.mxu0 0
    %741 = vmatpush1.bf16.msra.mxu0 0
    %742 = vmatprep.subr.bf16.mxu0 0
    %743 = vmatpush1.bf16.msra.mxu0 0
    %744 = vmatprep.subr.bf16.mxu0 0
    %745 = vmatpush1.bf16.msra.mxu0 0
    %746 = vmatprep.subr.bf16.mxu0 0
    %747 = vmatpush1.bf16.msra.mxu0 0
    %748 = vmatprep.subr.bf16.mxu0 0
    %749 = vmatpush1.bf16.msra.mxu0 0
    %750 = vmatprep.subr.bf16.mxu0 0
    %751 = vmatpush1.bf16.msra.mxu0 0
    %752 = vmatprep.subr.bf16.mxu0 0
    %753 = vmatpush1.bf16.msra.mxu0 0
    %754 = vmatprep.subr.bf16.mxu0 0
    %755 = vmatpush1.bf16.msra.mxu0 0
    %756 = vmatprep.subr.bf16.mxu0 0
    %757 = vmatpush1.bf16.msra.mxu0 0
    %758 = vmatprep.subr.bf16.mxu0 0
    %759 = vmatpush1.bf16.msra.mxu0 0
    %760 = vmatprep.subr.bf16.mxu0 0
    %761 = vmatpush1.bf16.msra.mxu0 0
    %762 = vmatprep.subr.bf16.mxu0 0
    %763 = vmatpush1.bf16.msra.mxu0 0
    %764 = vmatprep.mubr.bf16.mxu0 0
    %765 = vmatmul.mubr.bf16.gmra.mrb[0].mxu0 %v730
    %v766 = vpop.f32.mrb[0].mxu0
    %v767 = vadd.f32 %v702, %v766
    %v768 = vpop.f32.mrb[0].mxu0
    %v769 = vpop.f32.mrb[0].mxu0
    %v770 = vadd.f32 %v702, %v769
    %v771 = vpop.f32.mrb[0].mxu0
    %772 = vdwg.mxu0
    %v773 = vmax.f32 %v767, 0.0
    %v774 = vmax.f32 %v770, 0.0
    %v775 = vpack.c.bf16 %v774, %v773
    %v776 = vld [vmem:[%s9] sm:$0xff]
    %v777 = vld [vmem:[%s9 + $0x8] sm:$0xff]
    %v778 = vld [vmem:[%s9 + $0x10] sm:$0xff]
    %v779 = vld [vmem:[%s9 + $0x18] sm:$0xff]
    %v780 = vld [vmem:[%s9 + $0x20] sm:$0xff]
    %v781 = vld [vmem:[%s9 + $0x28] sm:$0xff]
    %v782 = vld [vmem:[%s9 + $0x30] sm:$0xff]
    %v783 = vld [vmem:[%s9 + $0x38] sm:$0xff]
    %v784 = vld [vmem:[%s10] sm:$0xf]
    %v786 = vlaneseq
    %v787 = vshrl.u32 %v786, 7
    %v788 = vsub.s32 0, %v787
    %v789 = vrot.slane %v784, %v788
    %v790 = vlaneseq
    %v791 = vshrl.u32 %v790, 7
    %v792 = vsub.s32 1, %v791
    %v793 = vrot.slane %v784, %v792
    %v794 = vlaneseq
    %v795 = vshrl.u32 %v794, 7
    %v796 = vsub.s32 2, %v795
    %v797 = vrot.slane %v784, %v796
    %v798 = vlaneseq
    %v799 = vshrl.u32 %v798, 7
    %v800 = vsub.s32 3, %v799
    %v801 = vrot.slane %v784, %v800
    %v814 = vunpack.c.l.b16 %v776
    %v815 = vunpack.c.h.b16 %v776
    %v816 = vunpack.c.l.b16 %v777
    %v817 = vunpack.c.h.b16 %v777
    %v818 = vunpack.c.l.b16 %v778
    %v819 = vunpack.c.h.b16 %v778
    %v820 = vunpack.c.l.b16 %v779
    %v821 = vunpack.c.h.b16 %v779
    %v822 = vunpack.c.l.b16 %v780
    %v823 = vunpack.c.h.b16 %v780
    %v824 = vunpack.c.l.b16 %v781
    %v825 = vunpack.c.h.b16 %v781
    %v826 = vunpack.c.l.b16 %v782
    %v827 = vunpack.c.h.b16 %v782
    %v828 = vunpack.c.l.b16 %v783
    %v829 = vunpack.c.h.b16 %v783
    %v830 = vpack.c.b16 %v818, %v814
    %v831 = vpack.c.b16 %v819, %v815
    %v832 = vpack.c.b16 %v820, %v816
    %v833 = vpack.c.b16 %v821, %v817
    %v834 = vpack.c.b16 %v826, %v822
    %v835 = vpack.c.b16 %v827, %v823
    %v836 = vpack.c.b16 %v828, %v824
    %v837 = vpack.c.b16 %v829, %v825
    %vm846 = vcmask 261120
    %v848 = vsel %vm846, %v775, 0
    %850 = vmatprep.subr.bf16.mxu0 %v831
    %851 = vmatpush1.bf16.msra.mxu0 %v830
    %852 = vmatprep.subr.bf16.mxu0 %v835
    %853 = vmatpush1.bf16.msra.mxu0 %v834
    %854 = vmatprep.subr.bf16.mxu0 0
    %855 = vmatpush1.bf16.msra.mxu0 0
    %856 = vmatprep.subr.bf16.mxu0 0
    %857 = vmatpush1.bf16.msra.mxu0 0
    %858 = vmatprep.subr.bf16.mxu0 0
    %859 = vmatpush1.bf16.msra.mxu0 0
    %860 = vmatprep.subr.bf16.mxu0 0
    %861 = vmatpush1.bf16.msra.mxu0 0
    %862 = vmatprep.subr.bf16.mxu0 0
    %863 = vmatpush1.bf16.msra.mxu0 0
    %864 = vmatprep.subr.bf16.mxu0 0
    %865 = vmatpush1.bf16.msra.mxu0 0
    %866 = vmatprep.subr.bf16.mxu0 0
    %867 = vmatpush1.bf16.msra.mxu0 0
    %868 = vmatprep.subr.bf16.mxu0 0
    %869 = vmatpush1.bf16.msra.mxu0 0
    %870 = vmatprep.subr.bf16.mxu0 0
    %871 = vmatpush1.bf16.msra.mxu0 0
    %872 = vmatprep.subr.bf16.mxu0 0
    %873 = vmatpush1.bf16.msra.mxu0 0
    %874 = vmatprep.subr.bf16.mxu0 0
    %875 = vmatpush1.bf16.msra.mxu0 0
    %876 = vmatprep.subr.bf16.mxu0 0
    %877 = vmatpush1.bf16.msra.mxu0 0
    %878 = vmatprep.subr.bf16.mxu0 0
    %879 = vmatpush1.bf16.msra.mxu0 0
    %880 = vmatprep.subr.bf16.mxu0 0
    %881 = vmatpush1.bf16.msra.mxu0 0
    %882 = vmatprep.mubr.bf16.mxu0 0
    %883 = vmatmul.mubr.bf16.gmra.mrb[0].mxu0 %v848
    %v884 = vpop.f32.mrb[0].mxu0
    %v885 = vadd.f32 %v789, %v884
    %v886 = vpop.f32.mrb[0].mxu0
    %v887 = vadd.f32 %v793, %v886
    %v888 = vpop.f32.mrb[0].mxu0
    %v889 = vadd.f32 %v789, %v888
    %v890 = vpop.f32.mrb[0].mxu0
    %v891 = vadd.f32 %v793, %v890
    %892 = vdwg.mxu0
    %893 = vmatprep.subr.bf16.mxu0 %v833
    %894 = vmatpush1.bf16.msra.mxu0 %v832
    %895 = vmatprep.subr.bf16.mxu0 %v837
    %896 = vmatpush1.bf16.msra.mxu0 %v836
    %897 = vmatprep.subr.bf16.mxu0 0
    %898 = vmatpush1.bf16.msra.mxu0 0
    %899 = vmatprep.subr.bf16.mxu0 0
    %900 = vmatpush1.bf16.msra.mxu0 0
    %901 = vmatprep.subr.bf16.mxu0 0
    %902 = vmatpush1.bf16.msra.mxu0 0
    %903 = vmatprep.subr.bf16.mxu0 0
    %904 = vmatpush1.bf16.msra.mxu0 0
    %905 = vmatprep.subr.bf16.mxu0 0
    %906 = vmatpush1.bf16.msra.mxu0 0
    %907 = vmatprep.subr.bf16.mxu0 0
    %908 = vmatpush1.bf16.msra.mxu0 0
    %909 = vmatprep.subr.bf16.mxu0 0
    %910 = vmatpush1.bf16.msra.mxu0 0
    %911 = vmatprep.subr.bf16.mxu0 0
    %912 = vmatpush1.bf16.msra.mxu0 0
    %913 = vmatprep.subr.bf16.mxu0 0
    %914 = vmatpush1.bf16.msra.mxu0 0
    %915 = vmatprep.subr.bf16.mxu0 0
    %916 = vmatpush1.bf16.msra.mxu0 0
    %917 = vmatprep.subr.bf16.mxu0 0
    %918 = vmatpush1.bf16.msra.mxu0 0
    %919 = vmatprep.subr.bf16.mxu0 0
    %920 = vmatpush1.bf16.msra.mxu0 0
    %921 = vmatprep.subr.bf16.mxu0 0
    %922 = vmatpush1.bf16.msra.mxu0 0
    %923 = vmatprep.subr.bf16.mxu0 0
    %924 = vmatpush1.bf16.msra.mxu0 0
    %925 = vmatprep.mubr.bf16.mxu0 0
    %926 = vmatmul.mubr.bf16.gmra.mrb[0].mxu0 %v848
    %v927 = vpop.f32.mrb[0].mxu0
    %v928 = vadd.f32 %v797, %v927
    %v929 = vpop.f32.mrb[0].mxu0
    %v930 = vadd.f32 %v801, %v929
    %v931 = vpop.f32.mrb[0].mxu0
    %v932 = vadd.f32 %v797, %v931
    %v933 = vpop.f32.mrb[0].mxu0
    %v934 = vadd.f32 %v801, %v933
    %935 = vdwg.mxu0
    %v936 = vld [vmem:[#allocation9] sm:$0xf]
    %v938 = vlaneseq
    %v939 = vshrl.u32 %v938, 7
    %v940 = vsub.s32 0, %v939
    %v941 = vrot.slane %v936, %v940
    %v942 = vlaneseq
    %v943 = vshrl.u32 %v942, 7
    %v944 = vsub.s32 1, %v943
    %v945 = vrot.slane %v936, %v944
    %v946 = vlaneseq
    %v947 = vshrl.u32 %v946, 7
    %v948 = vsub.s32 2, %v947
    %v949 = vrot.slane %v936, %v948
    %v950 = vlaneseq
    %v951 = vshrl.u32 %v950, 7
    %v952 = vsub.s32 3, %v951
    %v953 = vrot.slane %v936, %v952
    %v958 = vld [vmem:[#allocation7] sm:$0xff]
    %v959 = vld [vmem:[#allocation7 + $0x8] sm:$0xff]
    %v960 = vld [vmem:[#allocation7 + $0x10] sm:$0xff]
    %v961 = vld [vmem:[#allocation7 + $0x18] sm:$0xff]
    %v962 = vld [vmem:[#allocation7 + $0x20] sm:$0xff]
    %v963 = vld [vmem:[#allocation7 + $0x28] sm:$0xff]
    %v964 = vld [vmem:[#allocation7 + $0x30] sm:$0xff]
    %v965 = vld [vmem:[#allocation7 + $0x38] sm:$0xff]
    %v966 = vld [vmem:[#allocation7 + $0x40] sm:$0xff]
    %v967 = vld [vmem:[#allocation7 + $0x48] sm:$0xff]
    %v968 = vld [vmem:[#allocation7 + $0x50] sm:$0xff]
    %v969 = vld [vmem:[#allocation7 + $0x58] sm:$0xff]
    %v970 = vld [vmem:[#allocation7 + $0x60] sm:$0xff]
    %v971 = vld [vmem:[#allocation7 + $0x68] sm:$0xff]
    %v972 = vld [vmem:[#allocation7 + $0x70] sm:$0xff]
    %v973 = vld [vmem:[#allocation7 + $0x78] sm:$0xff]
    %v974 = vld [vmem:[#allocation7 + $0x80] sm:$0xff]
    %v975 = vld [vmem:[#allocation7 + $0x88] sm:$0xff]
    %v976 = vld [vmem:[#allocation7 + $0x90] sm:$0xff]
    %v977 = vld [vmem:[#allocation7 + $0x98] sm:$0xff]
    %v978 = vld [vmem:[#allocation7 + $0xa0] sm:$0xff]
    %v979 = vld [vmem:[#allocation7 + $0xa8] sm:$0xff]
    %v980 = vld [vmem:[#allocation7 + $0xb0] sm:$0xff]
    %v981 = vld [vmem:[#allocation7 + $0xb8] sm:$0xff]
    %v982 = vld [vmem:[#allocation7 + $0xc0] sm:$0xff]
    %v983 = vld [vmem:[#allocation7 + $0xc8] sm:$0xff]
    %v984 = vld [vmem:[#allocation7 + $0xd0] sm:$0xff]
    %v985 = vld [vmem:[#allocation7 + $0xd8] sm:$0xff]
    %v986 = vld [vmem:[#allocation7 + $0xe0] sm:$0xff]
    %v987 = vld [vmem:[#allocation7 + $0xe8] sm:$0xff]
    %v988 = vld [vmem:[#allocation7 + $0xf0] sm:$0xff]
    %v989 = vld [vmem:[#allocation7 + $0xf8] sm:$0xff]
    %v994 = vrot.slane %v889, 4
    %v995 = vrot.slane %v891, 4
    %v996 = vrot.slane %v932, 4
    %v997 = vrot.slane %v934, 4
    %vm1002 = vcmask 1043456
    %v1003 = vsel %vm1002, %v885, %v994
    %v1004 = vsel %vm1002, %v887, %v995
    %v1005 = vsel %vm1002, %v928, %v996
    %v1006 = vsel %vm1002, %v930, %v997
    %v1039 = vunpack.c.l.b16 %v958
    %v1040 = vunpack.c.h.b16 %v958
    %v1041 = vunpack.c.l.b16 %v959
    %v1042 = vunpack.c.h.b16 %v959
    %v1043 = vunpack.c.l.b16 %v960
    %v1044 = vunpack.c.h.b16 %v960
    %v1045 = vunpack.c.l.b16 %v961
    %v1046 = vunpack.c.h.b16 %v961
    %v1047 = vunpack.c.l.b16 %v962
    %v1048 = vunpack.c.h.b16 %v962
    %v1049 = vunpack.c.l.b16 %v963
    %v1050 = vunpack.c.h.b16 %v963
    %v1051 = vunpack.c.l.b16 %v964
    %v1052 = vunpack.c.h.b16 %v964
    %v1053 = vunpack.c.l.b16 %v965
    %v1054 = vunpack.c.h.b16 %v965
    %v1055 = vunpack.c.l.b16 %v966
    %v1056 = vunpack.c.h.b16 %v966
    %v1057 = vunpack.c.l.b16 %v967
    %v1058 = vunpack.c.h.b16 %v967
    %v1059 = vunpack.c.l.b16 %v968
    %v1060 = vunpack.c.h.b16 %v968
    %v1061 = vunpack.c.l.b16 %v969
    %v1062 = vunpack.c.h.b16 %v969
    %v1063 = vunpack.c.l.b16 %v970
    %v1064 = vunpack.c.h.b16 %v970
    %v1065 = vunpack.c.l.b16 %v971
    %v1066 = vunpack.c.h.b16 %v971
    %v1067 = vunpack.c.l.b16 %v972
    %v1068 = vunpack.c.h.b16 %v972
    %v1069 = vunpack.c.l.b16 %v973
    %v1070 = vunpack.c.h.b16 %v973
    %v1071 = vunpack.c.l.b16 %v974
    %v1072 = vunpack.c.h.b16 %v974
    %v1073 = vunpack.c.l.b16 %v975
    %v1074 = vunpack.c.h.b16 %v975
    %v1075 = vunpack.c.l.b16 %v976
    %v1076 = vunpack.c.h.b16 %v976
    %v1077 = vunpack.c.l.b16 %v977
    %v1078 = vunpack.c.h.b16 %v977
    %v1079 = vunpack.c.l.b16 %v978
    %v1080 = vunpack.c.h.b16 %v978
    %v1081 = vunpack.c.l.b16 %v979
    %v1082 = vunpack.c.h.b16 %v979
    %v1083 = vunpack.c.l.b16 %v980
    %v1084 = vunpack.c.h.b16 %v980
    %v1085 = vunpack.c.l.b16 %v981
    %v1086 = vunpack.c.h.b16 %v981
    %v1087 = vunpack.c.l.b16 %v982
    %v1088 = vunpack.c.h.b16 %v982
    %v1089 = vunpack.c.l.b16 %v983
    %v1090 = vunpack.c.h.b16 %v983
    %v1091 = vunpack.c.l.b16 %v984
    %v1092 = vunpack.c.h.b16 %v984
    %v1093 = vunpack.c.l.b16 %v985
    %v1094 = vunpack.c.h.b16 %v985
    %v1095 = vunpack.c.l.b16 %v986
    %v1096 = vunpack.c.h.b16 %v986
    %v1097 = vunpack.c.l.b16 %v987
    %v1098 = vunpack.c.h.b16 %v987
    %v1099 = vunpack.c.l.b16 %v988
    %v1100 = vunpack.c.h.b16 %v988
    %v1101 = vunpack.c.l.b16 %v989
    %v1102 = vunpack.c.h.b16 %v989
    %v1103 = vpack.c.b16 %v1043, %v1039
    %v1104 = vpack.c.b16 %v1044, %v1040
    %v1105 = vpack.c.b16 %v1045, %v1041
    %v1106 = vpack.c.b16 %v1046, %v1042
    %v1107 = vpack.c.b16 %v1051, %v1047
    %v1108 = vpack.c.b16 %v1052, %v1048
    %v1109 = vpack.c.b16 %v1053, %v1049
    %v1110 = vpack.c.b16 %v1054, %v1050
    %v1111 = vpack.c.b16 %v1059, %v1055
    %v1112 = vpack.c.b16 %v1060, %v1056
    %v1113 = vpack.c.b16 %v1061, %v1057
    %v1114 = vpack.c.b16 %v1062, %v1058
    %v1115 = vpack.c.b16 %v1067, %v1063
    %v1116 = vpack.c.b16 %v1068, %v1064
    %v1117 = vpack.c.b16 %v1069, %v1065
    %v1118 = vpack.c.b16 %v1070, %v1066
    %v1119 = vpack.c.b16 %v1075, %v1071
    %v1120 = vpack.c.b16 %v1076, %v1072
    %v1121 = vpack.c.b16 %v1077, %v1073
    %v1122 = vpack.c.b16 %v1078, %v1074
    %v1123 = vpack.c.b16 %v1083, %v1079
    %v1124 = vpack.c.b16 %v1084, %v1080
    %v1125 = vpack.c.b16 %v1085, %v1081
    %v1126 = vpack.c.b16 %v1086, %v1082
    %v1127 = vpack.c.b16 %v1091, %v1087
    %v1128 = vpack.c.b16 %v1092, %v1088
    %v1129 = vpack.c.b16 %v1093, %v1089
    %v1130 = vpack.c.b16 %v1094, %v1090
    %v1131 = vpack.c.b16 %v1099, %v1095
    %v1132 = vpack.c.b16 %v1100, %v1096
    %v1133 = vpack.c.b16 %v1101, %v1097
    %v1134 = vpack.c.b16 %v1102, %v1098
    %1167 = vmatprep.subr.bf16.mxu0 %v1104
    %1168 = vmatpush1.bf16.msra.mxu0 %v1103
    %1169 = vmatprep.subr.bf16.mxu0 %v1108
    %1170 = vmatpush1.bf16.msra.mxu0 %v1107
    %1171 = vmatprep.subr.bf16.mxu0 %v1112
    %1172 = vmatpush1.bf16.msra.mxu0 %v1111
    %1173 = vmatprep.subr.bf16.mxu0 %v1116
    %1174 = vmatpush1.bf16.msra.mxu0 %v1115
    %1175 = vmatprep.subr.bf16.mxu0 %v1120
    %1176 = vmatpush1.bf16.msra.mxu0 %v1119
    %1177 = vmatprep.subr.bf16.mxu0 %v1124
    %1178 = vmatpush1.bf16.msra.mxu0 %v1123
    %1179 = vmatprep.subr.bf16.mxu0 %v1128
    %1180 = vmatpush1.bf16.msra.mxu0 %v1127
    %1181 = vmatprep.subr.bf16.mxu0 %v1132
    %1182 = vmatpush1.bf16.msra.mxu0 %v1131
    %1183 = vmatprep.subr.bf16.mxu0 0
    %1184 = vmatpush1.bf16.msra.mxu0 0
    %1185 = vmatprep.subr.bf16.mxu0 0
    %1186 = vmatpush1.bf16.msra.mxu0 0
    %1187 = vmatprep.subr.bf16.mxu0 0
    %1188 = vmatpush1.bf16.msra.mxu0 0
    %1189 = vmatprep.subr.bf16.mxu0 0
    %1190 = vmatpush1.bf16.msra.mxu0 0
    %1191 = vmatprep.subr.bf16.mxu0 0
    %1192 = vmatpush1.bf16.msra.mxu0 0
    %1193 = vmatprep.subr.bf16.mxu0 0
    %1194 = vmatpush1.bf16.msra.mxu0 0
    %1195 = vmatprep.subr.bf16.mxu0 0
    %1196 = vmatpush1.bf16.msra.mxu0 0
    %1197 = vmatprep.subr.bf16.mxu0 0
    %1198 = vmatpush1.bf16.msra.mxu0 0
    %1199 = vmatprep.mubr.bf16.mxu0 0
    %1200 = vmatmul.mubr.bf16.gmra.mrb[0].mxu0 0
    %v1201 = vpop.f32.mrb[0].mxu0
    %v1202 = vadd.f32 0.0, %v1201
    %v1203 = vpop.f32.mrb[0].mxu0
    %v1204 = vadd.f32 0.0, %v1203
    %v1205 = vpop.f32.mrb[0].mxu0
    %v1206 = vpop.f32.mrb[0].mxu0
    %1207 = vdwg.mxu0
    %1208 = vmatprep.subr.bf16.mxu0 %v1106
    %1209 = vmatpush1.bf16.msra.mxu0 %v1105
    %1210 = vmatprep.subr.bf16.mxu0 %v1110
    %1211 = vmatpush1.bf16.msra.mxu0 %v1109
    %1212 = vmatprep.subr.bf16.mxu0 %v1114
    %1213 = vmatpush1.bf16.msra.mxu0 %v1113
    %1214 = vmatprep.subr.bf16.mxu0 %v1118
    %1215 = vmatpush1.bf16.msra.mxu0 %v1117
    %1216 = vmatprep.subr.bf16.mxu0 %v1122
    %1217 = vmatpush1.bf16.msra.mxu0 %v1121
    %1218 = vmatprep.subr.bf16.mxu0 %v1126
    %1219 = vmatpush1.bf16.msra.mxu0 %v1125
    %1220 = vmatprep.subr.bf16.mxu0 %v1130
    %1221 = vmatpush1.bf16.msra.mxu0 %v1129
    %1222 = vmatprep.subr.bf16.mxu0 %v1134
    %1223 = vmatpush1.bf16.msra.mxu0 %v1133
    %1224 = vmatprep.subr.bf16.mxu0 0
    %1225 = vmatpush1.bf16.msra.mxu0 0
    %1226 = vmatprep.subr.bf16.mxu0 0
    %1227 = vmatpush1.bf16.msra.mxu0 0
    %1228 = vmatprep.subr.bf16.mxu0 0
    %1229 = vmatpush1.bf16.msra.mxu0 0
    %1230 = vmatprep.subr.bf16.mxu0 0
    %1231 = vmatpush1.bf16.msra.mxu0 0
    %1232 = vmatprep.subr.bf16.mxu0 0
    %1233 = vmatpush1.bf16.msra.mxu0 0
    %1234 = vmatprep.subr.bf16.mxu0 0
    %1235 = vmatpush1.bf16.msra.mxu0 0
    %1236 = vmatprep.subr.bf16.mxu0 0
    %1237 = vmatpush1.bf16.msra.mxu0 0
    %1238 = vmatprep.subr.bf16.mxu0 0
    %1239 = vmatpush1.bf16.msra.mxu0 0
    %1240 = vmatprep.mubr.bf16.mxu0 0
    %1241 = vmatmul.mubr.bf16.gmra.mrb[0].mxu0 0
    %v1242 = vpop.f32.mrb[0].mxu0
    %v1243 = vadd.f32 0.0, %v1242
    %v1244 = vpop.f32.mrb[0].mxu0
    %v1245 = vadd.f32 0.0, %v1244
    %v1246 = vpop.f32.mrb[0].mxu0
    %v1247 = vpop.f32.mrb[0].mxu0
    %1248 = vdwg.mxu0
    %v1249 = vadd.f32 %v1003, %v1202
    %v1250 = vadd.f32 %v1004, %v1204
    %v1251 = vadd.f32 %v1005, %v1243
    %v1252 = vadd.f32 %v1006, %v1245
    %v1253 = vxor.u32 %v1249, 2147483648
    %v1254 = vmul.f32 %v1253, 1.442695
    %v1255 = vpow.pop %v1254
    %v1256 = vadd.f32 %v1255, 1.0
    %v1257 = vrcp.pop %v1256
    %v1258 = vmul.f32 1.0, %v1257
    %v1259 = vxor.u32 %v1250, 2147483648
    %v1260 = vmul.f32 %v1259, 1.442695
    %v1261 = vpow.pop %v1260
    %v1262 = vadd.f32 %v1261, 1.0
    %v1263 = vrcp.pop %v1262
    %v1264 = vmul.f32 1.0, %v1263
    %v1265 = vtanh.pop %v1251
    %v1266 = vxor.u32 %v1252, 2147483648
    %v1267 = vmul.f32 %v1266, 1.442695
    %v1268 = vpow.pop %v1267
    %v1269 = vadd.f32 %v1268, 1.0
    %v1270 = vrcp.pop %v1269
    %v1271 = vmul.f32 1.0, %v1270
    %v1272 = vmul.f32 %v1264, 0.0
    %v1273 = vmul.f32 %v1258, %v1265
    %v1274 = vadd.f32 %v1272, %v1273
    %v1275 = vtanh.pop %v1274
    %v1276 = vmul.f32 %v1271, %v1275
    %v1281 = vrot.slane %v885, 1
    %v1282 = vrot.slane %v887, 1
    %v1283 = vrot.slane %v928, 1
    %v1284 = vrot.slane %v930, 1
    %v1289 = vrot.slane %v889, 5
    %v1290 = vrot.slane %v891, 5
    %v1291 = vrot.slane %v932, 5
    %v1292 = vrot.slane %v934, 5
    %v1297 = vsel %vm1002, %v1281, %v1289
    %v1298 = vsel %vm1002, %v1282, %v1290
    %v1299 = vsel %vm1002, %v1283, %v1291
    %v1300 = vsel %vm1002, %v1284, %v1292
    %v1301 = vpack.c.bf16 %v1276, %v1276
    %1302 = vmatprep.subr.bf16.mxu0 %v1104
    %1303 = vmatpush1.bf16.msra.mxu0 %v1103
    %1304 = vmatprep.subr.bf16.mxu0 %v1108
    %1305 = vmatpush1.bf16.msra.mxu0 %v1107
    %1306 = vmatprep.subr.bf16.mxu0 %v1112
    %1307 = vmatpush1.bf16.msra.mxu0 %v1111
    %1308 = vmatprep.subr.bf16.mxu0 %v1116
    %1309 = vmatpush1.bf16.msra.mxu0 %v1115
    %1310 = vmatprep.subr.bf16.mxu0 %v1120
    %1311 = vmatpush1.bf16.msra.mxu0 %v1119
    %1312 = vmatprep.subr.bf16.mxu0 %v1124
    %1313 = vmatpush1.bf16.msra.mxu0 %v1123
    %1314 = vmatprep.subr.bf16.mxu0 %v1128
    %1315 = vmatpush1.bf16.msra.mxu0 %v1127
    %1316 = vmatprep.subr.bf16.mxu0 %v1132
    %1317 = vmatpush1.bf16.msra.mxu0 %v1131
    %1318 = vmatprep.subr.bf16.mxu0 0
    %1319 = vmatpush1.bf16.msra.mxu0 0
    %1320 = vmatprep.subr.bf16.mxu0 0
    %1321 = vmatpush1.bf16.msra.mxu0 0
    %1322 = vmatprep.subr.bf16.mxu0 0
    %1323 = vmatpush1.bf16.msra.mxu0 0
    %1324 = vmatprep.subr.bf16.mxu0 0
    %1325 = vmatpush1.bf16.msra.mxu0 0
    %1326 = vmatprep.subr.bf16.mxu0 0
    %1327 = vmatpush1.bf16.msra.mxu0 0
    %1328 = vmatprep.subr.bf16.mxu0 0
    %1329 = vmatpush1.bf16.msra.mxu0 0
    %1330 = vmatprep.subr.bf16.mxu0 0
    %1331 = vmatpush1.bf16.msra.mxu0 0
    %1332 = vmatprep.subr.bf16.mxu0 0
    %1333 = vmatpush1.bf16.msra.mxu0 0
    %1334 = vmatprep.mubr.bf16.mxu0 0
    %1335 = vmatmul.mubr.bf16.gmra.mrb[0].mxu0 %v1301
    %v1336 = vpop.f32.mrb[0].mxu0
    %v1337 = vadd.f32 0.0, %v1336
    %v1338 = vpop.f32.mrb[0].mxu0
    %v1339 = vadd.f32 0.0, %v1338
    %v1340 = vpop.f32.mrb[0].mxu0
    %v1341 = vpop.f32.mrb[0].mxu0
    %1342 = vdwg.mxu0
    %1343 = vmatprep.subr.bf16.mxu0 %v1106
    %1344 = vmatpush1.bf16.msra.mxu0 %v1105
    %1345 = vmatprep.subr.bf16.mxu0 %v1110
    %1346 = vmatpush1.bf16.msra.mxu0 %v1109
    %1347 = vmatprep.subr.bf16.mxu0 %v1114
    %1348 = vmatpush1.bf16.msra.mxu0 %v1113
    %1349 = vmatprep.subr.bf16.mxu0 %v1118
    %1350 = vmatpush1.bf16.msra.mxu0 %v1117
    %1351 = vmatprep.subr.bf16.mxu0 %v1122
    %1352 = vmatpush1.bf16.msra.mxu0 %v1121
    %1353 = vmatprep.subr.bf16.mxu0 %v1126
    %1354 = vmatpush1.bf16.msra.mxu0 %v1125
    %1355 = vmatprep.subr.bf16.mxu0 %v1130
    %1356 = vmatpush1.bf16.msra.mxu0 %v1129
    %1357 = vmatprep.subr.bf16.mxu0 %v1134
    %1358 = vmatpush1.bf16.msra.mxu0 %v1133
    %1359 = vmatprep.subr.bf16.mxu0 0
    %1360 = vmatpush1.bf16.msra.mxu0 0
    %1361 = vmatprep.subr.bf16.mxu0 0
    %1362 = vmatpush1.bf16.msra.mxu0 0
    %1363 = vmatprep.subr.bf16.mxu0 0
    %1364 = vmatpush1.bf16.msra.mxu0 0
    %1365 = vmatprep.subr.bf16.mxu0 0
    %1366 = vmatpush1.bf16.msra.mxu0 0
    %1367 = vmatprep.subr.bf16.mxu0 0
    %1368 = vmatpush1.bf16.msra.mxu0 0
    %1369 = vmatprep.subr.bf16.mxu0 0
    %1370 = vmatpush1.bf16.msra.mxu0 0
    %1371 = vmatprep.subr.bf16.mxu0 0
    %1372 = vmatpush1.bf16.msra.mxu0 0
    %1373 = vmatprep.subr.bf16.mxu0 0
    %1374 = vmatpush1.bf16.msra.mxu0 0
    %1375 = vmatprep.mubr.bf16.mxu0 0
    %1376 = vmatmul.mubr.bf16.gmra.mrb[0].mxu0 %v1301
    %v1377 = vpop.f32.mrb[0].mxu0
    %v1378 = vadd.f32 0.0, %v1377
    %v1379 = vpop.f32.mrb[0].mxu0
    %v1380 = vadd.f32 0.0, %v1379
    %v1381 = vpop.f32.mrb[0].mxu0
    %v1382 = vpop.f32.mrb[0].mxu0
    %1383 = vdwg.mxu0
    %v1384 = vadd.f32 %v1297, %v1337
    %v1385 = vadd.f32 %v1298, %v1339
    %v1386 = vadd.f32 %v1299, %v1378
    %v1387 = vadd.f32 %v1300, %v1380
    %v1388 = vxor.u32 %v1384, 2147483648
    %v1389 = vmul.f32 %v1388, 1.442695
    %v1390 = vpow.pop %v1389
    %v1391 = vadd.f32 %v1390, 1.0
    %v1392 = vrcp.pop %v1391
    %v1393 = vmul.f32 1.0, %v1392
    %v1394 = vxor.u32 %v1385, 2147483648
    %v1395 = vmul.f32 %v1394, 1.442695
    %v1396 = vpow.pop %v1395
    %v1397 = vadd.f32 %v1396, 1.0
    %v1398 = vrcp.pop %v1397
    %v1399 = vmul.f32 1.0, %v1398
    %v1400 = vtanh.pop %v1386
    %v1401 = vxor.u32 %v1387, 2147483648
    %v1402 = vmul.f32 %v1401, 1.442695
    %v1403 = vpow.pop %v1402
    %v1404 = vadd.f32 %v1403, 1.0
    %v1405 = vrcp.pop %v1404
    %v1406 = vmul.f32 1.0, %v1405
    %v1407 = vmul.f32 %v1399, %v1274
    %v1408 = vmul.f32 %v1393, %v1400
    %v1409 = vadd.f32 %v1407, %v1408
    %v1410 = vtanh.pop %v1409
    %v1411 = vmul.f32 %v1406, %v1410
    %v1412 = vrot.slane %v885, 2
    %v1413 = vrot.slane %v887, 2
    %v1414 = vrot.slane %v928, 2
    %v1415 = vrot.slane %v930, 2
    %v1420 = vrot.slane %v889, 6
    %v1421 = vrot.slane %v891, 6
    %v1422 = vrot.slane %v932, 6
    %v1423 = vrot.slane %v934, 6
    %v1428 = vsel %vm1002, %v1412, %v1420
    %v1429 = vsel %vm1002, %v1413, %v1421
    %v1430 = vsel %vm1002, %v1414, %v1422
    %v1431 = vsel %vm1002, %v1415, %v1423
    %v1432 = vpack.c.bf16 %v1411, %v1411
    %1433 = vmatprep.subr.bf16.mxu0 %v1104
    %1434 = vmatpush1.bf16.msra.mxu0 %v1103
    %1435 = vmatprep.subr.bf16.mxu0 %v1108
    %1436 = vmatpush1.bf16.msra.mxu0 %v1107
    %1437 = vmatprep.subr.bf16.mxu0 %v1112
    %1438 = vmatpush1.bf16.msra.mxu0 %v1111
    %1439 = vmatprep.subr.bf16.mxu0 %v1116
    %1440 = vmatpush1.bf16.msra.mxu0 %v1115
    %1441 = vmatprep.subr.bf16.mxu0 %v1120
    %1442 = vmatpush1.bf16.msra.mxu0 %v1119
    %1443 = vmatprep.subr.bf16.mxu0 %v1124
    %1444 = vmatpush1.bf16.msra.mxu0 %v1123
    %1445 = vmatprep.subr.bf16.mxu0 %v1128
    %1446 = vmatpush1.bf16.msra.mxu0 %v1127
    %1447 = vmatprep.subr.bf16.mxu0 %v1132
    %1448 = vmatpush1.bf16.msra.mxu0 %v1131
    %1449 = vmatprep.subr.bf16.mxu0 0
    %1450 = vmatpush1.bf16.msra.mxu0 0
    %1451 = vmatprep.subr.bf16.mxu0 0
    %1452 = vmatpush1.bf16.msra.mxu0 0
    %1453 = vmatprep.subr.bf16.mxu0 0
    %1454 = vmatpush1.bf16.msra.mxu0 0
    %1455 = vmatprep.subr.bf16.mxu0 0
    %1456 = vmatpush1.bf16.msra.mxu0 0
    %1457 = vmatprep.subr.bf16.mxu0 0
    %1458 = vmatpush1.bf16.msra.mxu0 0
    %1459 = vmatprep.subr.bf16.mxu0 0
    %1460 = vmatpush1.bf16.msra.mxu0 0
    %1461 = vmatprep.subr.bf16.mxu0 0
    %1462 = vmatpush1.bf16.msra.mxu0 0
    %1463 = vmatprep.subr.bf16.mxu0 0
    %1464 = vmatpush1.bf16.msra.mxu0 0
    %1465 = vmatprep.mubr.bf16.mxu0 0
    %1466 = vmatmul.mubr.bf16.gmra.mrb[0].mxu0 %v1432
    %v1467 = vpop.f32.mrb[0].mxu0
    %v1468 = vadd.f32 0.0, %v1467
    %v1469 = vpop.f32.mrb[0].mxu0
    %v1470 = vadd.f32 0.0, %v1469
    %v1471 = vpop.f32.mrb[0].mxu0
    %v1472 = vpop.f32.mrb[0].mxu0
    %1473 = vdwg.mxu0
    %1474 = vmatprep.subr.bf16.mxu0 %v1106
    %1475 = vmatpush1.bf16.msra.mxu0 %v1105
    %1476 = vmatprep.subr.bf16.mxu0 %v1110
    %1477 = vmatpush1.bf16.msra.mxu0 %v1109
    %1478 = vmatprep.subr.bf16.mxu0 %v1114
    %1479 = vmatpush1.bf16.msra.mxu0 %v1113
    %1480 = vmatprep.subr.bf16.mxu0 %v1118
    %1481 = vmatpush1.bf16.msra.mxu0 %v1117
    %1482 = vmatprep.subr.bf16.mxu0 %v1122
    %1483 = vmatpush1.bf16.msra.mxu0 %v1121
    %1484 = vmatprep.subr.bf16.mxu0 %v1126
    %1485 = vmatpush1.bf16.msra.mxu0 %v1125
    %1486 = vmatprep.subr.bf16.mxu0 %v1130
    %1487 = vmatpush1.bf16.msra.mxu0 %v1129
    %1488 = vmatprep.subr.bf16.mxu0 %v1134
    %1489 = vmatpush1.bf16.msra.mxu0 %v1133
    %1490 = vmatprep.subr.bf16.mxu0 0
    %1491 = vmatpush1.bf16.msra.mxu0 0
    %1492 = vmatprep.subr.bf16.mxu0 0
    %1493 = vmatpush1.bf16.msra.mxu0 0
    %1494 = vmatprep.subr.bf16.mxu0 0
    %1495 = vmatpush1.bf16.msra.mxu0 0
    %1496 = vmatprep.subr.bf16.mxu0 0
    %1497 = vmatpush1.bf16.msra.mxu0 0
    %1498 = vmatprep.subr.bf16.mxu0 0
    %1499 = vmatpush1.bf16.msra.mxu0 0
    %1500 = vmatprep.subr.bf16.mxu0 0
    %1501 = vmatpush1.bf16.msra.mxu0 0
    %1502 = vmatprep.subr.bf16.mxu0 0
    %1503 = vmatpush1.bf16.msra.mxu0 0
    %1504 = vmatprep.subr.bf16.mxu0 0
    %1505 = vmatpush1.bf16.msra.mxu0 0
    %1506 = vmatprep.mubr.bf16.mxu0 0
    %1507 = vmatmul.mubr.bf16.gmra.mrb[0].mxu0 %v1432
    %v1508 = vpop.f32.mrb[0].mxu0
    %v1509 = vadd.f32 0.0, %v1508
    %v1510 = vpop.f32.mrb[0].mxu0
    %v1511 = vadd.f32 0.0, %v1510
    %v1512 = vpop.f32.mrb[0].mxu0
    %v1513 = vpop.f32.mrb[0].mxu0
    %1514 = vdwg.mxu0
    %v1515 = vadd.f32 %v1428, %v1468
    %v1516 = vadd.f32 %v1429, %v1470
    %v1517 = vadd.f32 %v1430, %v1509
    %v1518 = vadd.f32 %v1431, %v1511
    %v1519 = vxor.u32 %v1515, 2147483648
    %v1520 = vmul.f32 %v1519, 1.442695
    %v1521 = vpow.pop %v1520
    %v1522 = vadd.f32 %v1521, 1.0
    %v1523 = vrcp.pop %v1522
    %v1524 = vmul.f32 1.0, %v1523
    %v1525 = vxor.u32 %v1516, 2147483648
    %v1526 = vmul.f32 %v1525, 1.442695
    %v1527 = vpow.pop %v1526
    %v1528 = vadd.f32 %v1527, 1.0
    %v1529 = vrcp.pop %v1528
    %v1530 = vmul.f32 1.0, %v1529
    %v1531 = vtanh.pop %v1517
    %v1532 = vxor.u32 %v1518, 2147483648
    %v1533 = vmul.f32 %v1532, 1.442695
    %v1534 = vpow.pop %v1533
    %v1535 = vadd.f32 %v1534, 1.0
    %v1536 = vrcp.pop %v1535
    %v1537 = vmul.f32 1.0, %v1536
    %v1538 = vmul.f32 %v1530, %v1409
    %v1539 = vmul.f32 %v1524, %v1531
    %v1540 = vadd.f32 %v1538, %v1539
    %v1541 = vtanh.pop %v1540
    %v1542 = vmul.f32 %v1537, %v1541
    %v1543 = vrot.slane %v885, 3
    %v1544 = vrot.slane %v887, 3
    %v1545 = vrot.slane %v928, 3
    %v1546 = vrot.slane %v930, 3
    %v1551 = vrot.slane %v889, 7
    %v1552 = vrot.slane %v891, 7
    %v1553 = vrot.slane %v932, 7
    %v1554 = vrot.slane %v934, 7
    %v1559 = vsel %vm1002, %v1543, %v1551
    %v1560 = vsel %vm1002, %v1544, %v1552
    %v1561 = vsel %vm1002, %v1545, %v1553
    %v1562 = vsel %vm1002, %v1546, %v1554
    %v1563 = vpack.c.bf16 %v1542, %v1542
    %1564 = vmatprep.subr.bf16.mxu0 %v1104
    %1565 = vmatpush1.bf16.msra.mxu0 %v1103
    %1566 = vmatprep.subr.bf16.mxu0 %v1108
    %1567 = vmatpush1.bf16.msra.mxu0 %v1107
    %1568 = vmatprep.subr.bf16.mxu0 %v1112
    %1569 = vmatpush1.bf16.msra.mxu0 %v1111
    %1570 = vmatprep.subr.bf16.mxu0 %v1116
    %1571 = vmatpush1.bf16.msra.mxu0 %v1115
    %1572 = vmatprep.subr.bf16.mxu0 %v1120
    %1573 = vmatpush1.bf16.msra.mxu0 %v1119
    %1574 = vmatprep.subr.bf16.mxu0 %v1124
    %1575 = vmatpush1.bf16.msra.mxu0 %v1123
    %1576 = vmatprep.subr.bf16.mxu0 %v1128
    %1577 = vmatpush1.bf16.msra.mxu0 %v1127
    %1578 = vmatprep.subr.bf16.mxu0 %v1132
    %1579 = vmatpush1.bf16.msra.mxu0 %v1131
    %1580 = vmatprep.subr.bf16.mxu0 0
    %1581 = vmatpush1.bf16.msra.mxu0 0
    %1582 = vmatprep.subr.bf16.mxu0 0
    %1583 = vmatpush1.bf16.msra.mxu0 0
    %1584 = vmatprep.subr.bf16.mxu0 0
    %1585 = vmatpush1.bf16.msra.mxu0 0
    %1586 = vmatprep.subr.bf16.mxu0 0
    %1587 = vmatpush1.bf16.msra.mxu0 0
    %1588 = vmatprep.subr.bf16.mxu0 0
    %1589 = vmatpush1.bf16.msra.mxu0 0
    %1590 = vmatprep.subr.bf16.mxu0 0
    %1591 = vmatpush1.bf16.msra.mxu0 0
    %1592 = vmatprep.subr.bf16.mxu0 0
    %1593 = vmatpush1.bf16.msra.mxu0 0
    %1594 = vmatprep.subr.bf16.mxu0 0
    %1595 = vmatpush1.bf16.msra.mxu0 0
    %1596 = vmatprep.mubr.bf16.mxu0 0
    %1597 = vmatmul.mubr.bf16.gmra.mrb[0].mxu0 %v1563
    %v1598 = vpop.f32.mrb[0].mxu0
    %v1599 = vadd.f32 0.0, %v1598
    %v1600 = vpop.f32.mrb[0].mxu0
    %v1601 = vadd.f32 0.0, %v1600
    %v1602 = vpop.f32.mrb[0].mxu0
    %v1603 = vpop.f32.mrb[0].mxu0
    %1604 = vdwg.mxu0
    %1605 = vmatprep.subr.bf16.mxu0 %v1106
    %1606 = vmatpush1.bf16.msra.mxu0 %v1105
    %1607 = vmatprep.subr.bf16.mxu0 %v1110
    %1608 = vmatpush1.bf16.msra.mxu0 %v1109
    %1609 = vmatprep.subr.bf16.mxu0 %v1114
    %1610 = vmatpush1.bf16.msra.mxu0 %v1113
    %1611 = vmatprep.subr.bf16.mxu0 %v1118
    %1612 = vmatpush1.bf16.msra.mxu0 %v1117
    %1613 = vmatprep.subr.bf16.mxu0 %v1122
    %1614 = vmatpush1.bf16.msra.mxu0 %v1121
    %1615 = vmatprep.subr.bf16.mxu0 %v1126
    %1616 = vmatpush1.bf16.msra.mxu0 %v1125
    %1617 = vmatprep.subr.bf16.mxu0 %v1130
    %1618 = vmatpush1.bf16.msra.mxu0 %v1129
    %1619 = vmatprep.subr.bf16.mxu0 %v1134
    %1620 = vmatpush1.bf16.msra.mxu0 %v1133
    %1621 = vmatprep.subr.bf16.mxu0 0
    %1622 = vmatpush1.bf16.msra.mxu0 0
    %1623 = vmatprep.subr.bf16.mxu0 0
    %1624 = vmatpush1.bf16.msra.mxu0 0
    %1625 = vmatprep.subr.bf16.mxu0 0
    %1626 = vmatpush1.bf16.msra.mxu0 0
    %1627 = vmatprep.subr.bf16.mxu0 0
    %1628 = vmatpush1.bf16.msra.mxu0 0
    %1629 = vmatprep.subr.bf16.mxu0 0
    %1630 = vmatpush1.bf16.msra.mxu0 0
    %1631 = vmatprep.subr.bf16.mxu0 0
    %1632 = vmatpush1.bf16.msra.mxu0 0
    %1633 = vmatprep.subr.bf16.mxu0 0
    %1634 = vmatpush1.bf16.msra.mxu0 0
    %1635 = vmatprep.subr.bf16.mxu0 0
    %1636 = vmatpush1.bf16.msra.mxu0 0
    %1637 = vmatprep.mubr.bf16.mxu0 0
    %1638 = vmatmul.mubr.bf16.gmra.mrb[0].mxu0 %v1563
    %v1639 = vpop.f32.mrb[0].mxu0
    %v1640 = vadd.f32 0.0, %v1639
    %v1641 = vpop.f32.mrb[0].mxu0
    %v1642 = vadd.f32 0.0, %v1641
    %v1643 = vpop.f32.mrb[0].mxu0
    %v1644 = vpop.f32.mrb[0].mxu0
    %1645 = vdwg.mxu0
    %v1646 = vadd.f32 %v1559, %v1599
    %v1647 = vadd.f32 %v1560, %v1601
    %v1648 = vadd.f32 %v1561, %v1640
    %v1649 = vadd.f32 %v1562, %v1642
    %v1650 = vxor.u32 %v1646, 2147483648
    %v1651 = vmul.f32 %v1650, 1.442695
    %v1652 = vpow.pop %v1651
    %v1653 = vadd.f32 %v1652, 1.0
    %v1654 = vrcp.pop %v1653
    %v1655 = vmul.f32 1.0, %v1654
    %v1656 = vxor.u32 %v1647, 2147483648
    %v1657 = vmul.f32 %v1656, 1.442695
    %v1658 = vpow.pop %v1657
    %v1659 = vadd.f32 %v1658, 1.0
    %v1660 = vrcp.pop %v1659
    %v1661 = vmul.f32 1.0, %v1660
    %v1662 = vtanh.pop %v1648
    %v1663 = vxor.u32 %v1649, 2147483648
    %v1664 = vmul.f32 %v1663, 1.442695
    %v1665 = vpow.pop %v1664
    %v1666 = vadd.f32 %v1665, 1.0
    %v1667 = vrcp.pop %v1666
    %v1668 = vmul.f32 1.0, %v1667
    %v1669 = vmul.f32 %v1661, %v1540
    %v1670 = vmul.f32 %v1655, %v1662
    %v1671 = vadd.f32 %v1669, %v1670
    %v1672 = vtanh.pop %v1671
    %v1673 = vmul.f32 %v1668, %v1672
    %v1674 = vrot.slane %v885, 4
    %v1675 = vrot.slane %v887, 4
    %v1676 = vrot.slane %v928, 4
    %v1677 = vrot.slane %v930, 4
    %v1682 = vsel %vm1002, %v1674, %v889
    %v1683 = vsel %vm1002, %v1675, %v891
    %v1684 = vsel %vm1002, %v1676, %v932
    %v1685 = vsel %vm1002, %v1677, %v934
    %v1686 = vpack.c.bf16 %v1673, %v1673
    %1687 = vmatprep.subr.bf16.mxu0 %v1104
    %1688 = vmatpush1.bf16.msra.mxu0 %v1103
    %1689 = vmatprep.subr.bf16.mxu0 %v1108
    %1690 = vmatpush1.bf16.msra.mxu0 %v1107
    %1691 = vmatprep.subr.bf16.mxu0 %v1112
    %1692 = vmatpush1.bf16.msra.mxu0 %v1111
    %1693 = vmatprep.subr.bf16.mxu0 %v1116
    %1694 = vmatpush1.bf16.msra.mxu0 %v1115
    %1695 = vmatprep.subr.bf16.mxu0 %v1120
    %1696 = vmatpush1.bf16.msra.mxu0 %v1119
    %1697 = vmatprep.subr.bf16.mxu0 %v1124
    %1698 = vmatpush1.bf16.msra.mxu0 %v1123
    %1699 = vmatprep.subr.bf16.mxu0 %v1128
    %1700 = vmatpush1.bf16.msra.mxu0 %v1127
    %1701 = vmatprep.subr.bf16.mxu0 %v1132
    %1702 = vmatpush1.bf16.msra.mxu0 %v1131
    %1703 = vmatprep.subr.bf16.mxu0 0
    %1704 = vmatpush1.bf16.msra.mxu0 0
    %1705 = vmatprep.subr.bf16.mxu0 0
    %1706 = vmatpush1.bf16.msra.mxu0 0
    %1707 = vmatprep.subr.bf16.mxu0 0
    %1708 = vmatpush1.bf16.msra.mxu0 0
    %1709 = vmatprep.subr.bf16.mxu0 0
    %1710 = vmatpush1.bf16.msra.mxu0 0
    %1711 = vmatprep.subr.bf16.mxu0 0
    %1712 = vmatpush1.bf16.msra.mxu0 0
    %1713 = vmatprep.subr.bf16.mxu0 0
    %1714 = vmatpush1.bf16.msra.mxu0 0
    %1715 = vmatprep.subr.bf16.mxu0 0
    %1716 = vmatpush1.bf16.msra.mxu0 0
    %1717 = vmatprep.subr.bf16.mxu0 0
    %1718 = vmatpush1.bf16.msra.mxu0 0
    %1719 = vmatprep.mubr.bf16.mxu0 0
    %1720 = vmatmul.mubr.bf16.gmra.mrb[0].mxu0 %v1686
    %v1721 = vpop.f32.mrb[0].mxu0
    %v1722 = vadd.f32 0.0, %v1721
    %v1723 = vpop.f32.mrb[0].mxu0
    %v1724 = vadd.f32 0.0, %v1723
    %v1725 = vpop.f32.mrb[0].mxu0
    %v1726 = vpop.f32.mrb[0].mxu0
    %1727 = vdwg.mxu0
    %1728 = vmatprep.subr.bf16.mxu0 %v1106
    %1729 = vmatpush1.bf16.msra.mxu0 %v1105
    %1730 = vmatprep.subr.bf16.mxu0 %v1110
    %1731 = vmatpush1.bf16.msra.mxu0 %v1109
    %1732 = vmatprep.subr.bf16.mxu0 %v1114
    %1733 = vmatpush1.bf16.msra.mxu0 %v1113
    %1734 = vmatprep.subr.bf16.mxu0 %v1118
    %1735 = vmatpush1.bf16.msra.mxu0 %v1117
    %1736 = vmatprep.subr.bf16.mxu0 %v1122
    %1737 = vmatpush1.bf16.msra.mxu0 %v1121
    %1738 = vmatprep.subr.bf16.mxu0 %v1126
    %1739 = vmatpush1.bf16.msra.mxu0 %v1125
    %1740 = vmatprep.subr.bf16.mxu0 %v1130
    %1741 = vmatpush1.bf16.msra.mxu0 %v1129
    %1742 = vmatprep.subr.bf16.mxu0 %v1134
    %1743 = vmatpush1.bf16.msra.mxu0 %v1133
    %1744 = vmatprep.subr.bf16.mxu0 0
    %1745 = vmatpush1.bf16.msra.mxu0 0
    %1746 = vmatprep.subr.bf16.mxu0 0
    %1747 = vmatpush1.bf16.msra.mxu0 0
    %1748 = vmatprep.subr.bf16.mxu0 0
    %1749 = vmatpush1.bf16.msra.mxu0 0
    %1750 = vmatprep.subr.bf16.mxu0 0
    %1751 = vmatpush1.bf16.msra.mxu0 0
    %1752 = vmatprep.subr.bf16.mxu0 0
    %1753 = vmatpush1.bf16.msra.mxu0 0
    %1754 = vmatprep.subr.bf16.mxu0 0
    %1755 = vmatpush1.bf16.msra.mxu0 0
    %1756 = vmatprep.subr.bf16.mxu0 0
    %1757 = vmatpush1.bf16.msra.mxu0 0
    %1758 = vmatprep.subr.bf16.mxu0 0
    %1759 = vmatpush1.bf16.msra.mxu0 0
    %1760 = vmatprep.mubr.bf16.mxu0 0
    %1761 = vmatmul.mubr.bf16.gmra.mrb[0].mxu0 %v1686
    %v1762 = vpop.f32.mrb[0].mxu0
    %v1763 = vadd.f32 0.0, %v1762
    %v1764 = vpop.f32.mrb[0].mxu0
    %v1765 = vadd.f32 0.0, %v1764
    %v1766 = vpop.f32.mrb[0].mxu0
    %v1767 = vpop.f32.mrb[0].mxu0
    %1768 = vdwg.mxu0
    %v1769 = vadd.f32 %v1682, %v1722
    %v1770 = vadd.f32 %v1683, %v1724
    %v1771 = vadd.f32 %v1684, %v1763
    %v1772 = vadd.f32 %v1685, %v1765
    %v1773 = vxor.u32 %v1769, 2147483648
    %v1774 = vmul.f32 %v1773, 1.442695
    %v1775 = vpow.pop %v1774
    %v1776 = vadd.f32 %v1775, 1.0
    %v1777 = vrcp.pop %v1776
    %v1778 = vmul.f32 1.0, %v1777
    %v1779 = vxor.u32 %v1770, 2147483648
    %v1780 = vmul.f32 %v1779, 1.442695
    %v1781 = vpow.pop %v1780
    %v1782 = vadd.f32 %v1781, 1.0
    %v1783 = vrcp.pop %v1782
    %v1784 = vmul.f32 1.0, %v1783
    %v1785 = vtanh.pop %v1771
    %v1786 = vxor.u32 %v1772, 2147483648
    %v1787 = vmul.f32 %v1786, 1.442695
    %v1788 = vpow.pop %v1787
    %v1789 = vadd.f32 %v1788, 1.0
    %v1790 = vrcp.pop %v1789
    %v1791 = vmul.f32 1.0, %v1790
    %v1792 = vmul.f32 %v1784, %v1671
    %v1793 = vmul.f32 %v1778, %v1785
    %v1794 = vadd.f32 %v1792, %v1793
    %v1795 = vtanh.pop %v1794
    %v1796 = vmul.f32 %v1791, %v1795
    %v1797 = vrot.slane %v885, 5
    %v1798 = vrot.slane %v887, 5
    %v1799 = vrot.slane %v928, 5
    %v1800 = vrot.slane %v930, 5
    %v1805 = vrot.slane %v889, 1
    %v1806 = vrot.slane %v891, 1
    %v1807 = vrot.slane %v932, 1
    %v1808 = vrot.slane %v934, 1
    %vm1813 = vcmask 1042432
    %v1814 = vsel %vm1813, %v1797, %v941
    %v1815 = vsel %vm1813, %v1798, %v945
    %v1816 = vsel %vm1813, %v1799, %v949
    %v1817 = vsel %vm1813, %v1800, %v953
    %v1818 = vsel %vm1002, %v1814, %v1805
    %v1819 = vsel %vm1002, %v1815, %v1806
    %v1820 = vsel %vm1002, %v1816, %v1807
    %v1821 = vsel %vm1002, %v1817, %v1808
    %vm1822 = vcmask 1046528
    %v1823 = vsel %vm1822, %v1818, %v941
    %v1824 = vsel %vm1822, %v1819, %v945
    %v1825 = vsel %vm1822, %v1820, %v949
    %v1826 = vsel %vm1822, %v1821, %v953
    %v1827 = vpack.c.bf16 %v1796, %v1796
    %1828 = vmatprep.subr.bf16.mxu0 %v1104
    %1829 = vmatpush1.bf16.msra.mxu0 %v1103
    %1830 = vmatprep.subr.bf16.mxu0 %v1108
    %1831 = vmatpush1.bf16.msra.mxu0 %v1107
    %1832 = vmatprep.subr.bf16.mxu0 %v1112
    %1833 = vmatpush1.bf16.msra.mxu0 %v1111
    %1834 = vmatprep.subr.bf16.mxu0 %v1116
    %1835 = vmatpush1.bf16.msra.mxu0 %v1115
    %1836 = vmatprep.subr.bf16.mxu0 %v1120
    %1837 = vmatpush1.bf16.msra.mxu0 %v1119
    %1838 = vmatprep.subr.bf16.mxu0 %v1124
    %1839 = vmatpush1.bf16.msra.mxu0 %v1123
    %1840 = vmatprep.subr.bf16.mxu0 %v1128
    %1841 = vmatpush1.bf16.msra.mxu0 %v1127
    %1842 = vmatprep.subr.bf16.mxu0 %v1132
    %1843 = vmatpush1.bf16.msra.mxu0 %v1131
    %1844 = vmatprep.subr.bf16.mxu0 0
    %1845 = vmatpush1.bf16.msra.mxu0 0
    %1846 = vmatprep.subr.bf16.mxu0 0
    %1847 = vmatpush1.bf16.msra.mxu0 0
    %1848 = vmatprep.subr.bf16.mxu0 0
    %1849 = vmatpush1.bf16.msra.mxu0 0
    %1850 = vmatprep.subr.bf16.mxu0 0
    %1851 = vmatpush1.bf16.msra.mxu0 0
    %1852 = vmatprep.subr.bf16.mxu0 0
    %1853 = vmatpush1.bf16.msra.mxu0 0
    %1854 = vmatprep.subr.bf16.mxu0 0
    %1855 = vmatpush1.bf16.msra.mxu0 0
    %1856 = vmatprep.subr.bf16.mxu0 0
    %1857 = vmatpush1.bf16.msra.mxu0 0
    %1858 = vmatprep.subr.bf16.mxu0 0
    %1859 = vmatpush1.bf16.msra.mxu0 0
    %1860 = vmatprep.mubr.bf16.mxu0 0
    %1861 = vmatmul.mubr.bf16.gmra.mrb[0].mxu0 %v1827
    %v1862 = vpop.f32.mrb[0].mxu0
    %v1863 = vadd.f32 0.0, %v1862
    %v1864 = vpop.f32.mrb[0].mxu0
    %v1865 = vadd.f32 0.0, %v1864
    %v1866 = vpop.f32.mrb[0].mxu0
    %v1867 = vpop.f32.mrb[0].mxu0
    %1868 = vdwg.mxu0
    %1869 = vmatprep.subr.bf16.mxu0 %v1106
    %1870 = vmatpush1.bf16.msra.mxu0 %v1105
    %1871 = vmatprep.subr.bf16.mxu0 %v1110
    %1872 = vmatpush1.bf16.msra.mxu0 %v1109
    %1873 = vmatprep.subr.bf16.mxu0 %v1114
    %1874 = vmatpush1.bf16.msra.mxu0 %v1113
    %1875 = vmatprep.subr.bf16.mxu0 %v1118
    %1876 = vmatpush1.bf16.msra.mxu0 %v1117
    %1877 = vmatprep.subr.bf16.mxu0 %v1122
    %1878 = vmatpush1.bf16.msra.mxu0 %v1121
    %1879 = vmatprep.subr.bf16.mxu0 %v1126
    %1880 = vmatpush1.bf16.msra.mxu0 %v1125
    %1881 = vmatprep.subr.bf16.mxu0 %v1130
    %1882 = vmatpush1.bf16.msra.mxu0 %v1129
    %1883 = vmatprep.subr.bf16.mxu0 %v1134
    %1884 = vmatpush1.bf16.msra.mxu0 %v1133
    %1885 = vmatprep.subr.bf16.mxu0 0
    %1886 = vmatpush1.bf16.msra.mxu0 0
    %1887 = vmatprep.subr.bf16.mxu0 0
    %1888 = vmatpush1.bf16.msra.mxu0 0
    %1889 = vmatprep.subr.bf16.mxu0 0
    %1890 = vmatpush1.bf16.msra.mxu0 0
    %1891 = vmatprep.subr.bf16.mxu0 0
    %1892 = vmatpush1.bf16.msra.mxu0 0
    %1893 = vmatprep.subr.bf16.mxu0 0
    %1894 = vmatpush1.bf16.msra.mxu0 0
    %1895 = vmatprep.subr.bf16.mxu0 0
    %1896 = vmatpush1.bf16.msra.mxu0 0
    %1897 = vmatprep.subr.bf16.mxu0 0
    %1898 = vmatpush1.bf16.msra.mxu0 0
    %1899 = vmatprep.subr.bf16.mxu0 0
    %1900 = vmatpush1.bf16.msra.mxu0 0
    %1901 = vmatprep.mubr.bf16.mxu0 0
    %1902 = vmatmul.mubr.bf16.gmra.mrb[0].mxu0 %v1827
    %v1903 = vpop.f32.mrb[0].mxu0
    %v1904 = vadd.f32 0.0, %v1903
    %v1905 = vpop.f32.mrb[0].mxu0
    %v1906 = vadd.f32 0.0, %v1905
    %v1907 = vpop.f32.mrb[0].mxu0
    %v1908 = vpop.f32.mrb[0].mxu0
    %1909 = vdwg.mxu0
    %v1910 = vadd.f32 %v1823, %v1863
    %v1911 = vadd.f32 %v1824, %v1865
    %v1912 = vadd.f32 %v1825, %v1904
    %v1913 = vadd.f32 %v1826, %v1906
    %v1914 = vxor.u32 %v1910, 2147483648
    %v1915 = vmul.f32 %v1914, 1.442695
    %v1916 = vpow.pop %v1915
    %v1917 = vadd.f32 %v1916, 1.0
    %v1918 = vrcp.pop %v1917
    %v1919 = vmul.f32 1.0, %v1918
    %v1920 = vxor.u32 %v1911, 2147483648
    %v1921 = vmul.f32 %v1920, 1.442695
    %v1922 = vpow.pop %v1921
    %v1923 = vadd.f32 %v1922, 1.0
    %v1924 = vrcp.pop %v1923
    %v1925 = vmul.f32 1.0, %v1924
    %v1926 = vtanh.pop %v1912
    %v1927 = vxor.u32 %v1913, 2147483648
    %v1928 = vmul.f32 %v1927, 1.442695
    %v1929 = vpow.pop %v1928
    %v1930 = vadd.f32 %v1929, 1.0
    %v1931 = vrcp.pop %v1930
    %v1932 = vmul.f32 1.0, %v1931
    %v1933 = vmul.f32 %v1925, %v1794
    %v1934 = vmul.f32 %v1919, %v1926
    %v1935 = vadd.f32 %v1933, %v1934
    %v1936 = vtanh.pop %v1935
    %v1937 = vmul.f32 %v1932, %v1936
    %v1938 = vrot.slane %v885, 6
    %v1939 = vrot.slane %v887, 6
    %v1940 = vrot.slane %v928, 6
    %v1941 = vrot.slane %v930, 6
    %v1946 = vrot.slane %v889, 2
    %v1947 = vrot.slane %v891, 2
    %v1948 = vrot.slane %v932, 2
    %v1949 = vrot.slane %v934, 2
    %vm1954 = vcmask 1041408
    %v1955 = vsel %vm1954, %v1938, %v941
    %v1956 = vsel %vm1954, %v1939, %v945
    %v1957 = vsel %vm1954, %v1940, %v949
    %v1958 = vsel %vm1954, %v1941, %v953
    %v1959 = vsel %vm1002, %v1955, %v1946
    %v1960 = vsel %vm1002, %v1956, %v1947
    %v1961 = vsel %vm1002, %v1957, %v1948
    %v1962 = vsel %vm1002, %v1958, %v1949
    %vm1963 = vcmask 1045504
    %v1964 = vsel %vm1963, %v1959, %v941
    %v1965 = vsel %vm1963, %v1960, %v945
    %v1966 = vsel %vm1963, %v1961, %v949
    %v1967 = vsel %vm1963, %v1962, %v953
    %v1968 = vpack.c.bf16 %v1937, %v1937
    %1969 = vmatprep.subr.bf16.mxu0 %v1104
    %1970 = vmatpush1.bf16.msra.mxu0 %v1103
    %1971 = vmatprep.subr.bf16.mxu0 %v1108
    %1972 = vmatpush1.bf16.msra.mxu0 %v1107
    %1973 = vmatprep.subr.bf16.mxu0 %v1112
    %1974 = vmatpush1.bf16.msra.mxu0 %v1111
    %1975 = vmatprep.subr.bf16.mxu0 %v1116
    %1976 = vmatpush1.bf16.msra.mxu0 %v1115
    %1977 = vmatprep.subr.bf16.mxu0 %v1120
    %1978 = vmatpush1.bf16.msra.mxu0 %v1119
    %1979 = vmatprep.subr.bf16.mxu0 %v1124
    %1980 = vmatpush1.bf16.msra.mxu0 %v1123
    %1981 = vmatprep.subr.bf16.mxu0 %v1128
    %1982 = vmatpush1.bf16.msra.mxu0 %v1127
    %1983 = vmatprep.subr.bf16.mxu0 %v1132
    %1984 = vmatpush1.bf16.msra.mxu0 %v1131
    %1985 = vmatprep.subr.bf16.mxu0 0
    %1986 = vmatpush1.bf16.msra.mxu0 0
    %1987 = vmatprep.subr.bf16.mxu0 0
    %1988 = vmatpush1.bf16.msra.mxu0 0
    %1989 = vmatprep.subr.bf16.mxu0 0
    %1990 = vmatpush1.bf16.msra.mxu0 0
    %1991 = vmatprep.subr.bf16.mxu0 0
    %1992 = vmatpush1.bf16.msra.mxu0 0
    %1993 = vmatprep.subr.bf16.mxu0 0
    %1994 = vmatpush1.bf16.msra.mxu0 0
    %1995 = vmatprep.subr.bf16.mxu0 0
    %1996 = vmatpush1.bf16.msra.mxu0 0
    %1997 = vmatprep.subr.bf16.mxu0 0
    %1998 = vmatpush1.bf16.msra.mxu0 0
    %1999 = vmatprep.subr.bf16.mxu0 0
    %2000 = vmatpush1.bf16.msra.mxu0 0
    %2001 = vmatprep.mubr.bf16.mxu0 0
    %2002 = vmatmul.mubr.bf16.gmra.mrb[0].mxu0 %v1968
    %v2003 = vpop.f32.mrb[0].mxu0
    %v2004 = vadd.f32 0.0, %v2003
    %v2005 = vpop.f32.mrb[0].mxu0
    %v2006 = vadd.f32 0.0, %v2005
    %v2007 = vpop.f32.mrb[0].mxu0
    %v2008 = vpop.f32.mrb[0].mxu0
    %2009 = vdwg.mxu0
    %2010 = vmatprep.subr.bf16.mxu0 %v1106
    %2011 = vmatpush1.bf16.msra.mxu0 %v1105
    %2012 = vmatprep.subr.bf16.mxu0 %v1110
    %2013 = vmatpush1.bf16.msra.mxu0 %v1109
    %2014 = vmatprep.subr.bf16.mxu0 %v1114
    %2015 = vmatpush1.bf16.msra.mxu0 %v1113
    %2016 = vmatprep.subr.bf16.mxu0 %v1118
    %2017 = vmatpush1.bf16.msra.mxu0 %v1117
    %2018 = vmatprep.subr.bf16.mxu0 %v1122
    %2019 = vmatpush1.bf16.msra.mxu0 %v1121
    %2020 = vmatprep.subr.bf16.mxu0 %v1126
    %2021 = vmatpush1.bf16.msra.mxu0 %v1125
    %2022 = vmatprep.subr.bf16.mxu0 %v1130
    %2023 = vmatpush1.bf16.msra.mxu0 %v1129
    %2024 = vmatprep.subr.bf16.mxu0 %v1134
    %2025 = vmatpush1.bf16.msra.mxu0 %v1133
    %2026 = vmatprep.subr.bf16.mxu0 0
    %2027 = vmatpush1.bf16.msra.mxu0 0
    %2028 = vmatprep.subr.bf16.mxu0 0
    %2029 = vmatpush1.bf16.msra.mxu0 0
    %2030 = vmatprep.subr.bf16.mxu0 0
    %2031 = vmatpush1.bf16.msra.mxu0 0
    %2032 = vmatprep.subr.bf16.mxu0 0
    %2033 = vmatpush1.bf16.msra.mxu0 0
    %2034 = vmatprep.subr.bf16.mxu0 0
    %2035 = vmatpush1.bf16.msra.mxu0 0
    %2036 = vmatprep.subr.bf16.mxu0 0
    %2037 = vmatpush1.bf16.msra.mxu0 0
    %2038 = vmatprep.subr.bf16.mxu0 0
    %2039 = vmatpush1.bf16.msra.mxu0 0
    %2040 = vmatprep.subr.bf16.mxu0 0
    %2041 = vmatpush1.bf16.msra.mxu0 0
    %2042 = vmatprep.mubr.bf16.mxu0 0
    %2043 = vmatmul.mubr.bf16.gmra.mrb[0].mxu0 %v1968
    %v2044 = vpop.f32.mrb[0].mxu0
    %v2045 = vadd.f32 0.0, %v2044
    %v2046 = vpop.f32.mrb[0].mxu0
    %v2047 = vadd.f32 0.0, %v2046
    %v2048 = vpop.f32.mrb[0].mxu0
    %v2049 = vpop.f32.mrb[0].mxu0
    %2050 = vdwg.mxu0
    %v2051 = vadd.f32 %v1964, %v2004
    %v2052 = vadd.f32 %v1965, %v2006
    %v2053 = vadd.f32 %v1966, %v2045
    %v2054 = vadd.f32 %v1967, %v2047
    %v2055 = vxor.u32 %v2051, 2147483648
    %v2056 = vmul.f32 %v2055, 1.442695
    %v2057 = vpow.pop %v2056
    %v2058 = vadd.f32 %v2057, 1.0
    %v2059 = vrcp.pop %v2058
    %v2060 = vmul.f32 1.0, %v2059
    %v2061 = vxor.u32 %v2052, 2147483648
    %v2062 = vmul.f32 %v2061, 1.442695
    %v2063 = vpow.pop %v2062
    %v2064 = vadd.f32 %v2063, 1.0
    %v2065 = vrcp.pop %v2064
    %v2066 = vmul.f32 1.0, %v2065
    %v2067 = vtanh.pop %v2053
    %v2068 = vxor.u32 %v2054, 2147483648
    %v2069 = vmul.f32 %v2068, 1.442695
    %v2070 = vpow.pop %v2069
    %v2071 = vadd.f32 %v2070, 1.0
    %v2072 = vrcp.pop %v2071
    %v2073 = vmul.f32 1.0, %v2072
    %v2074 = vmul.f32 %v2066, %v1935
    %v2075 = vmul.f32 %v2060, %v2067
    %v2076 = vadd.f32 %v2074, %v2075
    %v2077 = vtanh.pop %v2076
    %v2078 = vmul.f32 %v2073, %v2077
    %v2079 = vrot.slane %v885, 7
    %v2080 = vrot.slane %v887, 7
    %v2081 = vrot.slane %v928, 7
    %v2082 = vrot.slane %v930, 7
    %v2087 = vrot.slane %v889, 3
    %v2088 = vrot.slane %v891, 3
    %v2089 = vrot.slane %v932, 3
    %v2090 = vrot.slane %v934, 3
    %vm2095 = vcmask 1040384
    %v2096 = vsel %vm2095, %v2079, %v941
    %v2097 = vsel %vm2095, %v2080, %v945
    %v2098 = vsel %vm2095, %v2081, %v949
    %v2099 = vsel %vm2095, %v2082, %v953
    %v2100 = vsel %vm1002, %v2096, %v2087
    %v2101 = vsel %vm1002, %v2097, %v2088
    %v2102 = vsel %vm1002, %v2098, %v2089
    %v2103 = vsel %vm1002, %v2099, %v2090
    %vm2104 = vcmask 1044480
    %v2105 = vsel %vm2104, %v2100, %v941
    %v2106 = vsel %vm2104, %v2101, %v945
    %v2107 = vsel %vm2104, %v2102, %v949
    %v2108 = vsel %vm2104, %v2103, %v953
    %v2109 = vpack.c.bf16 %v2078, %v2078
    %2110 = vmatprep.subr.bf16.mxu0 %v1104
    %2111 = vmatpush1.bf16.msra.mxu0 %v1103
    %2112 = vmatprep.subr.bf16.mxu0 %v1108
    %2113 = vmatpush1.bf16.msra.mxu0 %v1107
    %2114 = vmatprep.subr.bf16.mxu0 %v1112
    %2115 = vmatpush1.bf16.msra.mxu0 %v1111
    %2116 = vmatprep.subr.bf16.mxu0 %v1116
    %2117 = vmatpush1.bf16.msra.mxu0 %v1115
    %2118 = vmatprep.subr.bf16.mxu0 %v1120
    %2119 = vmatpush1.bf16.msra.mxu0 %v1119
    %2120 = vmatprep.subr.bf16.mxu0 %v1124
    %2121 = vmatpush1.bf16.msra.mxu0 %v1123
    %2122 = vmatprep.subr.bf16.mxu0 %v1128
    %2123 = vmatpush1.bf16.msra.mxu0 %v1127
    %2124 = vmatprep.subr.bf16.mxu0 %v1132
    %2125 = vmatpush1.bf16.msra.mxu0 %v1131
    %2126 = vmatprep.subr.bf16.mxu0 0
    %2127 = vmatpush1.bf16.msra.mxu0 0
    %2128 = vmatprep.subr.bf16.mxu0 0
    %2129 = vmatpush1.bf16.msra.mxu0 0
    %2130 = vmatprep.subr.bf16.mxu0 0
    %2131 = vmatpush1.bf16.msra.mxu0 0
    %2132 = vmatprep.subr.bf16.mxu0 0
    %2133 = vmatpush1.bf16.msra.mxu0 0
    %2134 = vmatprep.subr.bf16.mxu0 0
    %2135 = vmatpush1.bf16.msra.mxu0 0
    %2136 = vmatprep.subr.bf16.mxu0 0
    %2137 = vmatpush1.bf16.msra.mxu0 0
    %2138 = vmatprep.subr.bf16.mxu0 0
    %2139 = vmatpush1.bf16.msra.mxu0 0
    %2140 = vmatprep.subr.bf16.mxu0 0
    %2141 = vmatpush1.bf16.msra.mxu0 0
    %2142 = vmatprep.mubr.bf16.mxu0 0
    %2143 = vmatmul.mubr.bf16.gmra.mrb[0].mxu0 %v2109
    %v2144 = vpop.f32.mrb[0].mxu0
    %v2145 = vadd.f32 0.0, %v2144
    %v2146 = vpop.f32.mrb[0].mxu0
    %v2147 = vadd.f32 0.0, %v2146
    %v2148 = vpop.f32.mrb[0].mxu0
    %v2149 = vpop.f32.mrb[0].mxu0
    %2150 = vdwg.mxu0
    %2151 = vmatprep.subr.bf16.mxu0 %v1106
    %2152 = vmatpush1.bf16.msra.mxu0 %v1105
    %2153 = vmatprep.subr.bf16.mxu0 %v1110
    %2154 = vmatpush1.bf16.msra.mxu0 %v1109
    %2155 = vmatprep.subr.bf16.mxu0 %v1114
    %2156 = vmatpush1.bf16.msra.mxu0 %v1113
    %2157 = vmatprep.subr.bf16.mxu0 %v1118
    %2158 = vmatpush1.bf16.msra.mxu0 %v1117
    %2159 = vmatprep.subr.bf16.mxu0 %v1122
    %2160 = vmatpush1.bf16.msra.mxu0 %v1121
    %2161 = vmatprep.subr.bf16.mxu0 %v1126
    %2162 = vmatpush1.bf16.msra.mxu0 %v1125
    %2163 = vmatprep.subr.bf16.mxu0 %v1130
    %2164 = vmatpush1.bf16.msra.mxu0 %v1129
    %2165 = vmatprep.subr.bf16.mxu0 %v1134
    %2166 = vmatpush1.bf16.msra.mxu0 %v1133
    %2167 = vmatprep.subr.bf16.mxu0 0
    %2168 = vmatpush1.bf16.msra.mxu0 0
    %2169 = vmatprep.subr.bf16.mxu0 0
    %2170 = vmatpush1.bf16.msra.mxu0 0
    %2171 = vmatprep.subr.bf16.mxu0 0
    %2172 = vmatpush1.bf16.msra.mxu0 0
    %2173 = vmatprep.subr.bf16.mxu0 0
    %2174 = vmatpush1.bf16.msra.mxu0 0
    %2175 = vmatprep.subr.bf16.mxu0 0
    %2176 = vmatpush1.bf16.msra.mxu0 0
    %2177 = vmatprep.subr.bf16.mxu0 0
    %2178 = vmatpush1.bf16.msra.mxu0 0
    %2179 = vmatprep.subr.bf16.mxu0 0
    %2180 = vmatpush1.bf16.msra.mxu0 0
    %2181 = vmatprep.subr.bf16.mxu0 0
    %2182 = vmatpush1.bf16.msra.mxu0 0
    %2183 = vmatprep.mubr.bf16.mxu0 0
    %2184 = vmatmul.mubr.bf16.gmra.mrb[0].mxu0 %v2109
    %v2185 = vpop.f32.mrb[0].mxu0
    %v2186 = vadd.f32 0.0, %v2185
    %v2187 = vpop.f32.mrb[0].mxu0
    %v2188 = vadd.f32 0.0, %v2187
    %v2189 = vpop.f32.mrb[0].mxu0
    %v2190 = vpop.f32.mrb[0].mxu0
    %2191 = vdwg.mxu0
    %v2192 = vadd.f32 %v2105, %v2145
    %v2193 = vadd.f32 %v2106, %v2147
    %v2194 = vadd.f32 %v2107, %v2186
    %v2195 = vadd.f32 %v2108, %v2188
    %v2196 = vxor.u32 %v2192, 2147483648
    %v2197 = vmul.f32 %v2196, 1.442695
    %v2198 = vpow.pop %v2197
    %v2199 = vadd.f32 %v2198, 1.0
    %v2200 = vrcp.pop %v2199
    %v2201 = vmul.f32 1.0, %v2200
    %v2202 = vxor.u32 %v2193, 2147483648
    %v2203 = vmul.f32 %v2202, 1.442695
    %v2204 = vpow.pop %v2203
    %v2205 = vadd.f32 %v2204, 1.0
    %v2206 = vrcp.pop %v2205
    %v2207 = vmul.f32 1.0, %v2206
    %v2208 = vtanh.pop %v2194
    %v2209 = vxor.u32 %v2195, 2147483648
    %v2210 = vmul.f32 %v2209, 1.442695
    %v2211 = vpow.pop %v2210
    %v2212 = vadd.f32 %v2211, 1.0
    %v2213 = vrcp.pop %v2212
    %v2214 = vmul.f32 1.0, %v2213
    %v2215 = vmul.f32 %v2207, %v2076
    %v2216 = vmul.f32 %v2201, %v2208
    %v2217 = vadd.f32 %v2215, %v2216
    %v2218 = vtanh.pop %v2217
    %v2219 = vmul.f32 %v2214, %v2218
    %v2220 = vpack.c.bf16 %v2219, %v2219
    %v2221 = vld [vmem:[#allocation10] sm:$0xf]
    %v2222 = vld [vmem:[#allocation10 + $0x4] sm:$0xf]
    %v2223 = vld [vmem:[#allocation10 + $0x8] sm:$0xf]
    %v2224 = vld [vmem:[#allocation10 + $0xc] sm:$0xf]
    %v2225 = vld [vmem:[#allocation10 + $0x10] sm:$0xf]
    %v2226 = vld [vmem:[#allocation10 + $0x14] sm:$0xf]
    %v2227 = vld [vmem:[#allocation10 + $0x18] sm:$0xf]
    %v2228 = vld [vmem:[#allocation10 + $0x1c] sm:$0xf]
    %v2229 = vld [vmem:[#allocation10 + $0x20] sm:$0xf]
    %v2230 = vld [vmem:[#allocation10 + $0x24] sm:$0xf]
    %v2231 = vld [vmem:[#allocation10 + $0x28] sm:$0xf]
    %v2232 = vld [vmem:[#allocation10 + $0x2c] sm:$0xf]
    %v2233 = vld [vmem:[#allocation10 + $0x30] sm:$0xf]
    %v2234 = vld [vmem:[#allocation10 + $0x34] sm:$0xf]
    %v2235 = vld [vmem:[#allocation10 + $0x38] sm:$0xf]
    %v2236 = vld [vmem:[#allocation10 + $0x3c] sm:$0xf]
    %v2237 = vld [vmem:[#allocation12] sm:$0x1]
    %v2239 = vlaneseq
    %v2240 = vshrl.u32 %v2239, 7
    %v2241 = vsub.s32 0, %v2240
    %v2242 = vrot.slane %v2237, %v2241
    %v2260 = vunpack.c.l.b16 %v2221
    %v2261 = vunpack.c.l.b16 %v2222
    %v2262 = vunpack.c.l.b16 %v2223
    %v2263 = vunpack.c.l.b16 %v2224
    %v2264 = vunpack.c.l.b16 %v2225
    %v2265 = vunpack.c.l.b16 %v2226
    %v2266 = vunpack.c.l.b16 %v2227
    %v2267 = vunpack.c.l.b16 %v2228
    %v2268 = vunpack.c.l.b16 %v2229
    %v2269 = vunpack.c.l.b16 %v2230
    %v2270 = vunpack.c.l.b16 %v2231
    %v2271 = vunpack.c.l.b16 %v2232
    %v2272 = vunpack.c.l.b16 %v2233
    %v2273 = vunpack.c.l.b16 %v2234
    %v2274 = vunpack.c.l.b16 %v2235
    %v2275 = vunpack.c.l.b16 %v2236
    %v2276 = vpack.c.b16 %v2261, %v2260
    %v2277 = vpack.c.b16 %v2263, %v2262
    %v2278 = vpack.c.b16 %v2265, %v2264
    %v2279 = vpack.c.b16 %v2267, %v2266
    %v2280 = vpack.c.b16 %v2269, %v2268
    %v2281 = vpack.c.b16 %v2271, %v2270
    %v2282 = vpack.c.b16 %v2273, %v2272
    %v2283 = vpack.c.b16 %v2275, %v2274
    %2292 = vmatprep.subr.bf16.mxu0 0
    %2293 = vmatpush1.bf16.msra.mxu0 %v2276
    %2294 = vmatprep.subr.bf16.mxu0 0
    %2295 = vmatpush1.bf16.msra.mxu0 %v2277
    %2296 = vmatprep.subr.bf16.mxu0 0
    %2297 = vmatpush1.bf16.msra.mxu0 %v2278
    %2298 = vmatprep.subr.bf16.mxu0 0
    %2299 = vmatpush1.bf16.msra.mxu0 %v2279
    %2300 = vmatprep.subr.bf16.mxu0 0
    %2301 = vmatpush1.bf16.msra.mxu0 %v2280
    %2302 = vmatprep.subr.bf16.mxu0 0
    %2303 = vmatpush1.bf16.msra.mxu0 %v2281
    %2304 = vmatprep.subr.bf16.mxu0 0
    %2305 = vmatpush1.bf16.msra.mxu0 %v2282
    %2306 = vmatprep.subr.bf16.mxu0 0
    %2307 = vmatpush1.bf16.msra.mxu0 %v2283
    %2308 = vmatprep.subr.bf16.mxu0 0
    %2309 = vmatpush1.bf16.msra.mxu0 0
    %2310 = vmatprep.subr.bf16.mxu0 0
    %2311 = vmatpush1.bf16.msra.mxu0 0
    %2312 = vmatprep.subr.bf16.mxu0 0
    %2313 = vmatpush1.bf16.msra.mxu0 0
    %2314 = vmatprep.subr.bf16.mxu0 0
    %2315 = vmatpush1.bf16.msra.mxu0 0
    %2316 = vmatprep.subr.bf16.mxu0 0
    %2317 = vmatpush1.bf16.msra.mxu0 0
    %2318 = vmatprep.subr.bf16.mxu0 0
    %2319 = vmatpush1.bf16.msra.mxu0 0
    %2320 = vmatprep.subr.bf16.mxu0 0
    %2321 = vmatpush1.bf16.msra.mxu0 0
    %2322 = vmatprep.subr.bf16.mxu0 0
    %2323 = vmatpush1.bf16.msra.mxu0 0
    %2324 = vmatprep.mubr.bf16.mxu0 0
    %2325 = vmatmul.mubr.bf16.gmra.mrb[0].mxu0 %v2220
    %v2326 = vpop.f32.mrb[0].mxu0
    %v2327 = vadd.f32 %v2242, %v2326
    %v2328 = vpop.f32.mrb[0].mxu0
    %v2329 = vpop.f32.mrb[0].mxu0
    %v2330 = vpop.f32.mrb[0].mxu0
    %2331 = vdwg.mxu0
    %2332 = vst [vmem:[%s15] sm:$0xf] %v2327
    %s2333 = scalar_lea.vmem %s15, 4
    %2334 = vst [vmem:[%s2333 - $0x4] sm:$0xf0] %v2327
    // Predicated region
    $region90: #{reward_induced_rep_forward.1} parent=1 // pred_check
      _
    $region91: #{reward_induced_rep_forward.1} parent=1 // pred_check_branch
      %2336 = sbr.rel (0) target = $region93
    $region92: #{reward_induced_rep_forward.1} parent=1 // pred_region
      _
    $region93: #{reward_induced_rep_forward.1} parent=1 // pred_fallthru
      _
    // Predicated region
    $region94: #{reward_induced_rep_forward.1} parent=1 // pred_check
      _
    $region95: #{reward_induced_rep_forward.1} parent=1 // pred_check_branch
      %2338 = sbr.rel (0) target = $region97
    $region96: #{reward_induced_rep_forward.1} parent=1 // pred_region
      _
    $region97: #{reward_induced_rep_forward.1} parent=1 // pred_fallthru
      _
    %2339 = vsyncpa [#allocation3], 1
    %2340 = vsyncpa [#allocation5], 1
    %2341 = vsyncpa [#allocation8], 1
    %2342 = vsyncpa [#allocation11], 1

</llo_original>
